<compile_context>
chip_gen: v7x
topology: tpu7x:2x2x1
jax: 0.10.0
libtpu: 0.0.40
codegen_flags: <defaults>
</compile_context>

<pallas_src>
import functools

import jax
import jax.numpy as jnp
from jax.experimental import pallas as pl
from jax.experimental.pallas import tpu as pltpu

LN_EPS = 1e-5
LANE = 128
SUBLANE = 8
NODE_TILE = 8192                       # default nodes per grid step (~1 MiB f32 x at H=32)
MAX_X_TILE_BYTES = 4 * 1024 * 1024     # cap on a single streamed x tile
VMEM_LIMIT_BYTES = 32 * 1024 * 1024    # safe on v5e (128 MiB), v6e (128 MiB), v7x (64 MiB)


def _round_up(a, b):
    return (a + b - 1) // b * b


def _cdiv(a, b):
    return (a + b - 1) // b


def _pad2(a, rows, cols):
    a = jnp.asarray(a, jnp.float32)
    return jnp.zeros((rows, cols), jnp.float32).at[: a.shape[0], : a.shape[1]].set(a)


def _block_spec(shape, index_map, buffers=None):
    """BlockSpec with optional pipeline depth; falls back cleanly if unsupported."""
    if buffers is not None and hasattr(pl, "Buffered"):
        try:
            return pl.BlockSpec(shape, index_map, pipeline_mode=pl.Buffered(buffers))
        except TypeError:
            pass
    return pl.BlockSpec(shape, index_map)


def _const_spec(shape):
    # Constant-index operands (weights / biases / u): one VMEM buffer is enough.
    return _block_spec(shape, lambda *_: (0,) * len(shape), buffers=1)


# --------------------------------------------------------------------------- #
# Kernel math helpers (shared between the fused kernel and the epilogue).
# --------------------------------------------------------------------------- #
def _segment_sum_tile(x, batch, n_graphs):
    """Per-tile scatter_sum(x, batch) as one_hot(B, TN) @ x(TN, H) on the MXU."""
    tn = x.shape[0]
    ids = jax.lax.broadcasted_iota(jnp.int32, (n_graphs, tn), 0)
    one_hot = (ids == batch).astype(x.dtype)          # padded ids (-1) never match
    prec = (jax.lax.Precision.HIGHEST if x.dtype == jnp.float32
            else jax.lax.Precision.DEFAULT)
    return jnp.dot(one_hot, x, preferred_element_type=jnp.float32, precision=prec)


def _mlp_residual(u, agg, w1u, w1a, b1, w2, b2, w3, b3, lng, lnb, w4, b4, ln_dim):
    """u + MLP(cat([u, agg], 1));  cat @ W1 == u @ W1[:H] + agg @ W1[H:]."""
    h = (jnp.dot(u, w1u, preferred_element_type=jnp.float32)
         + jnp.dot(agg, w1a, preferred_element_type=jnp.float32)
         + b1)
    h = jnp.maximum(h, 0.0)
    h = jnp.maximum(jnp.dot(h, w2, preferred_element_type=jnp.float32) + b2, 0.0)
    h = jnp.maximum(jnp.dot(h, w3, preferred_element_type=jnp.float32) + b3, 0.0)

    # LayerNorm over the real ln_dim features. Padded MLP columns are exactly zero
    # (zero-padded weights/biases), so the padded-width sum / ln_dim is the true
    # mean; variance is masked explicitly; padded gamma/beta re-zero padded cols.
    inv_n = 1.0 / float(ln_dim)
    col = jax.lax.broadcasted_iota(jnp.int32, (1, h.shape[1]), 1)
    mask = (col < ln_dim).astype(h.dtype)
    mean = jnp.sum(h, axis=-1, keepdims=True) * inv_n
    d = (h - mean) * mask
    var = jnp.sum(d * d, axis=-1, keepdims=True) * inv_n
    h = (h - mean) * jax.lax.rsqrt(var + LN_EPS)
    h = h * lng + lnb

    y = jnp.dot(h, w4, preferred_element_type=jnp.float32) + b4
    return u + y


# --------------------------------------------------------------------------- #
# Kernels.
# --------------------------------------------------------------------------- #
def _fused_kernel(x_ref, batch_ref, u_ref,
                  w1u_ref, w1a_ref, b1_ref, w2_ref, b2_ref, w3_ref, b3_ref,
                  lng_ref, lnb_ref, w4_ref, b4_ref,
                  out_ref, agg_ref, *, ln_dim):
    """Streamed node reduction into a resident VMEM accumulator + fused MLP."""
    t = pl.program_id(0)

    @pl.when(t == 0)
    def _init():
        agg_ref[...] = jnp.zeros_like(agg_ref)

    agg_ref[...] += _segment_sum_tile(x_ref[...], batch_ref[...], agg_ref.shape[0])

    @pl.when(t == pl.num_programs(0) - 1)
    def _finalize():
        out = _mlp_residual(
            u_ref[...], agg_ref[...],
            w1u_ref[...], w1a_ref[...], b1_ref[...], w2_ref[...], b2_ref[...],
            w3_ref[...], b3_ref[...], lng_ref[...], lnb_ref[...],
            w4_ref[...], b4_ref[...], ln_dim)
        out_ref[...] = out.astype(out_ref.dtype)


def _agg_kernel(x_ref, batch_ref, part_ref, agg_ref):
    """Per-chunk partial aggregation (chunk axis is 'parallel' -> v7x 2x TCs)."""
    t = pl.program_id(1)

    @pl.when(t == 0)
    def _init():
        agg_ref[...] = jnp.zeros_like(agg_ref)

    agg_ref[...] += _segment_sum_tile(x_ref[...], batch_ref[...], agg_ref.shape[0])

    @pl.when(t == pl.num_programs(1) - 1)
    def _finalize():
        part_ref[...] = agg_ref[...]


def _mlp_kernel(part_ref, u_ref,
                w1u_ref, w1a_ref, b1_ref, w2_ref, b2_ref, w3_ref, b3_ref,
                lng_ref, lnb_ref, w4_ref, b4_ref,
                out_ref, *, ln_dim):
    """Tiny epilogue: combine per-chunk partial aggregates, then fused MLP."""
    agg = part_ref[0]
    for c in range(1, part_ref.shape[0]):     # chunks is a small static constant
        agg = agg + part_ref[c]
    out = _mlp_residual(
        u_ref[...], agg,
        w1u_ref[...], w1a_ref[...], b1_ref[...], w2_ref[...], b2_ref[...],
        w3_ref[...], b3_ref[...], lng_ref[...], lnb_ref[...],
        w4_ref[...], b4_ref[...], ln_dim)
    out_ref[...] = out.astype(out_ref.dtype)


# --------------------------------------------------------------------------- #
# Host-side wrappers.
# --------------------------------------------------------------------------- #
def prepare_params(params, hidden):
    """Pad / split MLP weights ONCE (hoisted out of the per-call path)."""
    H = hidden
    MH = params["w2"].shape[0]
    MH_pad = _round_up(max(MH, LANE), LANE)
    w1 = jnp.asarray(params["w1"], jnp.float32)          # (2H, MH)
    weights = (
        _pad2(w1[:H], H, MH_pad),                        # w1u
        _pad2(w1[H:], H, MH_pad),                        # w1a
        _pad2(params["b1"], 1, MH_pad),
        _pad2(params["w2"], MH_pad, MH_pad),
        _pad2(params["b2"], 1, MH_pad),
        _pad2(params["w3"], MH_pad, MH_pad),
        _pad2(params["b3"], 1, MH_pad),
        _pad2(params["ln_g"], 1, MH_pad),
        _pad2(params["ln_b"], 1, MH_pad),
        _pad2(params["w4"], MH_pad, H),
        _pad2(params["b4"], 1, H),
    )
    return {"ln_dim": int(MH), "weights": weights}


def global_model_forward(x, batch, u, prepared, *, node_tile=NODE_TILE,
                         num_node_chunks=1, x_dtype=jnp.float32):
    """x: (N, H), batch: (N,) int graph ids in [0, B), u: (B, H).

    num_node_chunks=1 -> single fused kernel (aggregation + MLP).
    num_node_chunks>=2 -> 'parallel' chunk axis for v7x's two TensorCores
    (partial aggregation kernel) + tiny fused MLP epilogue kernel.
    NOTE: batch ids must lie in [0, B); out-of-range ids are dropped / discarded.
    """
    N, H = x.shape
    B = u.shape[0]
    ln_dim = prepared["ln_dim"]
    weights = prepared["weights"]
    MH_pad = weights[3].shape[0]

    B_pad = _round_up(max(B, SUBLANE), SUBLANE)
    chunks = max(1, int(num_node_chunks))

    # ---- node tiling at native H lanes (no 4x feature padding of x in HBM) ----
    N8 = _round_up(max(N, SUBLANE), SUBLANE)
    itemsize = jnp.dtype(x_dtype).itemsize
    max_tn = max(LANE, (MAX_X_TILE_BYTES // max(H * itemsize, 1)) // LANE * LANE)
    if chunks == 1 and N8 <= min(node_tile, max_tn):
        TN, tiles_per_chunk = N8, 1
    else:
        TN = max(LANE, _round_up(min(node_tile, max_tn, N8), LANE))
        tiles_per_chunk = _cdiv(_cdiv(N8, TN), chunks)
    N_pad = chunks * tiles_per_chunk * TN
    stream_buf = 3 if tiles_per_chunk >= 3 else 2

    # ---- pad node / batch / global arrays (only what is actually needed) ----
    xf = jnp.asarray(x, x_dtype)
    if N_pad == N:
        x_p = xf
        batch_p = jnp.asarray(batch, jnp.int32).reshape(1, N)
    else:
        x_p = jnp.zeros((N_pad, H), x_dtype).at[:N].set(xf)
        batch_p = jnp.full((1, N_pad), -1, jnp.int32).at[0, :N].set(
            jnp.asarray(batch, jnp.int32))
    u_p = jnp.zeros((B_pad, H), jnp.float32).at[:B].set(jnp.asarray(u, jnp.float32))

    param_elems = sum(int(w.size) for w in weights)
    agg_flops = 2 * B_pad * N_pad * H
    mlp_flops = 2 * B_pad * (2 * H * MH_pad + 2 * MH_pad * MH_pad + MH_pad * H)
    x_bytes = itemsize * N_pad * H + 4 * N_pad

    weight_specs = [_const_spec(w.shape) for w in weights]
    compiler_params = pltpu.CompilerParams(
        dimension_semantics=("arbitrary",) if chunks == 1 else ("parallel", "arbitrary"),
        vmem_limit_bytes=VMEM_LIMIT_BYTES,
    )

    if chunks == 1:
        # ------------------ single fused kernel ------------------
        in_specs = [
            _block_spec((TN, H), lambda t: (t, 0), buffers=stream_buf),   # x (streamed)
            _block_spec((1, TN), lambda t: (0, t), buffers=stream_buf),   # batch ids
            _const_spec((B_pad, H)),                                      # u (resident)
        ] + weight_specs
        cost = pl.CostEstimate(
            flops=agg_flops + mlp_flops,
            transcendentals=B_pad,
            bytes_accessed=x_bytes + 4 * (2 * B_pad * H + param_elems),
        )
        out_p = pl.pallas_call(
            functools.partial(_fused_kernel, ln_dim=ln_dim),
            out_shape=jax.ShapeDtypeStruct((B_pad, H), jnp.float32),
            grid_spec=pltpu.PrefetchScalarGridSpec(
                num_scalar_prefetch=0,
                grid=(tiles_per_chunk,),
                in_specs=in_specs,
                out_specs=pl.BlockSpec((B_pad, H), lambda t: (0, 0)),
                scratch_shapes=[pltpu.VMEM((B_pad, H), jnp.float32)],
            ),
            compiler_params=compiler_params,
            input_output_aliases={2: 0},       # padded u buffer -> padded output buffer
            cost_estimate=cost,
        )(x_p, batch_p, u_p, *weights)
        return out_p[:B, :H]

    # ------------------ phase 1: per-chunk partial aggregation ------------------
    agg_cost = pl.CostEstimate(
        flops=agg_flops, transcendentals=0,
        bytes_accessed=x_bytes + 4 * chunks * B_pad * H,
    )
    part = pl.pallas_call(
        _agg_kernel,
        out_shape=jax.ShapeDtypeStruct((chunks, B_pad, H), jnp.float32),
        grid_spec=pltpu.PrefetchScalarGridSpec(
            num_scalar_prefetch=0,
            grid=(chunks, tiles_per_chunk),
            in_specs=[
                _block_spec((TN, H), lambda c, t: (c * tiles_per_chunk + t, 0),
                            buffers=stream_buf),
                _block_spec((1, TN), lambda c, t: (0, c * tiles_per_chunk + t),
                            buffers=stream_buf),
            ],
            out_specs=pl.BlockSpec((None, B_pad, H), lambda c, t: (c, 0, 0)),
            scratch_shapes=[pltpu.VMEM((B_pad, H), jnp.float32)],
        ),
        compiler_params=compiler_params,
        cost_estimate=agg_cost,
    )(x_p, batch_p)

    # ------------------ phase 2: combine partials + MLP + residual ------------------
    in_specs = [
        _block_spec((chunks, B_pad, H), lambda i: (0, 0, 0), buffers=1),
        _const_spec((B_pad, H)),
    ] + weight_specs
    out_p = pl.pallas_call(
        functools.partial(_mlp_kernel, ln_dim=ln_dim),
        out_shape=jax.ShapeDtypeStruct((B_pad, H), jnp.float32),
        grid_spec=pltpu.PrefetchScalarGridSpec(
            num_scalar_prefetch=0,
            grid=(1,),
            in_specs=in_specs,
            out_specs=pl.BlockSpec((B_pad, H), lambda i: (0, 0)),
        ),
        compiler_params=pltpu.CompilerParams(
            dimension_semantics=("arbitrary",),
            vmem_limit_bytes=VMEM_LIMIT_BYTES,
        ),
        input_output_aliases={1: 0},
    )(part, u_p, *weights)
    return out_p[:B, :H]


# --------------------------------------------------------------------------- #
# Synthetic params + pure-JAX reference for verification.
# --------------------------------------------------------------------------- #
def init_params(key, hidden, mlp_hidden=64):
    """Deterministic synthetic init matching MLP(hidden*2, hidden, hidden=64, nlayers=2)."""
    ks = jax.random.split(key, 4)

    def lin(k, n_in, n_out):
        scale = 1.0 / jnp.sqrt(n_in)
        kw, kb = jax.random.split(k)
        w = jax.random.uniform(kw, (n_in, n_out), jnp.float32, -scale, scale)
        b = jax.random.uniform(kb, (1, n_out), jnp.float32, -scale, scale)
        return w, b

    w1, b1 = lin(ks[0], 2 * hidden, mlp_hidden)
    w2, b2 = lin(ks[1], mlp_hidden, mlp_hidden)
    w3, b3 = lin(ks[2], mlp_hidden, mlp_hidden)
    w4, b4 = lin(ks[3], mlp_hidden, hidden)
    return dict(
        w1=w1, b1=b1, w2=w2, b2=b2, w3=w3, b3=b3,
        ln_g=jnp.ones((1, mlp_hidden), jnp.float32),
        ln_b=jnp.zeros((1, mlp_hidden), jnp.float32),
        w4=w4, b4=b4,
    )


def reference_forward(x, batch, u, params):
    """Pure-JAX reference of the PyTorch forward."""
    B = u.shape[0]
    agg = jax.ops.segment_sum(x, batch, num_segments=B)
    out = jnp.concatenate([u, agg], axis=1)
    h = jnp.maximum(out @ params["w1"] + params["b1"], 0.0)
    h = jnp.maximum(h @ params["w2"] + params["b2"], 0.0)
    h = jnp.maximum(h @ params["w3"] + params["b3"], 0.0)
    mean = jnp.mean(h, axis=-1, keepdims=True)
    var = jnp.mean(jnp.square(h - mean), axis=-1, keepdims=True)
    h = (h - mean) * jax.lax.rsqrt(var + LN_EPS) * params["ln_g"] + params["ln_b"]
    return u + (h @ params["w4"] + params["b4"])


if __name__ == "__main__":
    hidden = 32                       # per-graph / per-node feature width

    key = jax.random.PRNGKey(0)
    kx, ku, kp, kx2, ku2 = jax.random.split(key, 5)
    params = init_params(kp, hidden)
    prepared = prepare_params(params, hidden)     # pad weights once, reuse per call

    # --- small case (module's toy shapes): fused single-tile path ---
    B, N = 2, 8
    x = jax.random.normal(kx, (N, hidden), jnp.float32)
    u = jax.random.normal(ku, (B, hidden), jnp.float32)
    batch = jnp.array([0, 0, 0, 0, 1, 1, 1, 1], dtype=jnp.int32)   # node -> graph id

    out = jax.block_until_ready(global_model_forward(x, batch, u, prepared))
    ref = reference_forward(x, batch, u, params)
    assert out.shape == (B, hidden)
    assert jnp.allclose(out, ref, atol=1e-4, rtol=1e-4), "mismatch vs reference (small)"

    # --- larger case: exercises the multi-tile accumulator grid (3 node tiles) ---
    B2, N2 = 4, 300
    x2 = jax.random.normal(kx2, (N2, hidden), jnp.float32)
    u2 = jax.random.normal(ku2, (B2, hidden), jnp.float32)
    nodes_per_graph = (N2 + B2 - 1) // B2
    batch2 = jnp.clip(jnp.arange(N2) // nodes_per_graph, 0, B2 - 1).astype(jnp.int32)
    ref2 = reference_forward(x2, batch2, u2, params)

    out2 = jax.block_until_ready(
        global_model_forward(x2, batch2, u2, prepared, node_tile=128))
    assert out2.shape == (B2, hidden)
    assert jnp.allclose(out2, ref2, atol=5e-4, rtol=5e-4), "mismatch vs reference (tiled)"

    # --- multi-chunk path: 'parallel' node-chunk axis (v7x two-TensorCore layout) ---
    out3 = jax.block_until_ready(
        global_model_forward(x2, batch2, u2, prepared, node_tile=128, num_node_chunks=2))
    assert out3.shape == (B2, hidden)
    assert jnp.allclose(out3, ref2, atol=5e-4, rtol=5e-4), "mismatch vs reference (chunked)"

    print("KERNEL_OK")
</pallas_src>

<mosaic_0001>
module attributes {stable_mosaic.version = 11 : i64} {
  func.func @_fused_kernel(%arg0: i32, %arg1: memref<8x32xf32, #tpu.memory_space<vmem>>, %arg2: memref<1x8xi32, #tpu.memory_space<vmem>>, %arg3: memref<8x32xf32, #tpu.memory_space<vmem>>, %arg4: memref<32x128xf32, #tpu.memory_space<vmem>>, %arg5: memref<32x128xf32, #tpu.memory_space<vmem>>, %arg6: memref<1x128xf32, #tpu.memory_space<vmem>>, %arg7: memref<128x128xf32, #tpu.memory_space<vmem>>, %arg8: memref<1x128xf32, #tpu.memory_space<vmem>>, %arg9: memref<128x128xf32, #tpu.memory_space<vmem>>, %arg10: memref<1x128xf32, #tpu.memory_space<vmem>>, %arg11: memref<1x128xf32, #tpu.memory_space<vmem>>, %arg12: memref<1x128xf32, #tpu.memory_space<vmem>>, %arg13: memref<128x32xf32, #tpu.memory_space<vmem>>, %arg14: memref<1x32xf32, #tpu.memory_space<vmem>>, %arg15: memref<8x32xf32, #tpu.memory_space<vmem>>, %arg16: memref<8x32xf32, #tpu.memory_space<vmem>>) attributes {dimension_semantics = [#tpu.dimension_semantics<arbitrary>], iteration_bounds = array<i64: 1>, scalar_prefetch = 0 : i64, scratch_operands = 1 : i64, tpu.core_type = #tpu.core_type<tc>, window_params = [{pipeline_mode = #tpu.pipeline_mode<double_buffered>, transform_indices = @transform_0, window_bounds = array<i64: 8, 32>}, {pipeline_mode = #tpu.pipeline_mode<double_buffered>, transform_indices = @transform_1, window_bounds = array<i64: 1, 8>}, {pipeline_mode = #tpu.pipeline_mode<synchronous>, transform_indices = @transform_2, window_bounds = array<i64: 8, 32>}, {pipeline_mode = #tpu.pipeline_mode<synchronous>, transform_indices = @transform_3, window_bounds = array<i64: 32, 128>}, {pipeline_mode = #tpu.pipeline_mode<synchronous>, transform_indices = @transform_4, window_bounds = array<i64: 32, 128>}, {pipeline_mode = #tpu.pipeline_mode<synchronous>, transform_indices = @transform_5, window_bounds = array<i64: 1, 128>}, {pipeline_mode = #tpu.pipeline_mode<synchronous>, transform_indices = @transform_6, window_bounds = array<i64: 128, 128>}, {pipeline_mode = #tpu.pipeline_mode<synchronous>, transform_indices = @transform_7, window_bounds = array<i64: 1, 128>}, {pipeline_mode = #tpu.pipeline_mode<synchronous>, transform_indices = @transform_8, window_bounds = array<i64: 128, 128>}, {pipeline_mode = #tpu.pipeline_mode<synchronous>, transform_indices = @transform_9, window_bounds = array<i64: 1, 128>}, {pipeline_mode = #tpu.pipeline_mode<synchronous>, transform_indices = @transform_10, window_bounds = array<i64: 1, 128>}, {pipeline_mode = #tpu.pipeline_mode<synchronous>, transform_indices = @transform_11, window_bounds = array<i64: 1, 128>}, {pipeline_mode = #tpu.pipeline_mode<synchronous>, transform_indices = @transform_12, window_bounds = array<i64: 128, 32>}, {pipeline_mode = #tpu.pipeline_mode<synchronous>, transform_indices = @transform_13, window_bounds = array<i64: 1, 32>}, {pipeline_mode = #tpu.pipeline_mode<synchronous>, transform_indices = @transform_14, window_bounds = array<i64: 8, 32>}]} {
    %c0_i32 = arith.constant 0 : i32
    %0 = arith.cmpi eq, %arg0, %c0_i32 : i32
    %1 = arith.extui %0 : i1 to i32
    %c0_i32_0 = arith.constant 0 : i32
    %2 = arith.cmpi ne, %1, %c0_i32_0 : i32
    scf.if %2 {
      %cst_10 = arith.constant 0.000000e+00 : f32
      %17 = vector.broadcast %cst_10 : f32 to vector<8x32xf32>
      %c0_11 = arith.constant 0 : index
      %c0_12 = arith.constant 0 : index
      %18 = vector.load %arg16[%c0_11, %c0_12] : memref<8x32xf32, #tpu.memory_space<vmem>>, vector<8x32xf32>
      tpu.vector_store %arg16[%c0_11, %c0_12], %17 {strides = array<i32>} : memref<8x32xf32, #tpu.memory_space<vmem>>, vector<8x32xf32>,
    } else {
    }
    %c0 = arith.constant 0 : index
    %c0_1 = arith.constant 0 : index
    %3 = vector.load %arg16[%c0, %c0_1] : memref<8x32xf32, #tpu.memory_space<vmem>>, vector<8x32xf32>
    %c0_2 = arith.constant 0 : index
    %c0_3 = arith.constant 0 : index
    %4 = vector.load %arg1[%c0_2, %c0_3] : memref<8x32xf32, #tpu.memory_space<vmem>>, vector<8x32xf32>
    %c0_4 = arith.constant 0 : index
    %c0_5 = arith.constant 0 : index
    %5 = vector.load %arg2[%c0_4, %c0_5] : memref<1x8xi32, #tpu.memory_space<vmem>>, vector<1x8xi32>
    %6 = tpu.iota {dimensions = array<i32: 0>} : vector<8x8xi32>
    %7 = vector.broadcast %5 : vector<1x8xi32> to vector<8x8xi32>
    %8 = arith.cmpi eq, %6, %7 : vector<8x8xi32>
    %9 = arith.extui %8 : vector<8x8xi1> to vector<8x8xi32>
    %10 = arith.sitofp %9 : vector<8x8xi32> to vector<8x8xf32>
    %cst = arith.constant dense<0.000000e+00> : vector<8x32xf32>
    %11 = tpu.matmul %10, %4, %cst {dimension_numbers = #tpu.dot_dimension_numbers<[1], [0], [0], [1], [0, 0, 1, 1], [], []>, precision = #tpu.contract_precision<fp32>} : vector<8x8xf32>, vector<8x32xf32>, vector<8x32xf32> -> vector<8x32xf32>
    %12 = arith.addf %3, %11 : vector<8x32xf32>
    %c0_6 = arith.constant 0 : index
    %c0_7 = arith.constant 0 : index
    %13 = vector.load %arg16[%c0_6, %c0_7] : memref<8x32xf32, #tpu.memory_space<vmem>>, vector<8x32xf32>
    tpu.vector_store %arg16[%c0_6, %c0_7], %12 {strides = array<i32>} : memref<8x32xf32, #tpu.memory_space<vmem>>, vector<8x32xf32>,
    %c0_i32_8 = arith.constant 0 : i32
    %14 = arith.cmpi eq, %arg0, %c0_i32_8 : i32
    %15 = arith.extui %14 : i1 to i32
    %c0_i32_9 = arith.constant 0 : i32
    %16 = arith.cmpi ne, %15, %c0_i32_9 : i32
    scf.if %16 {
      %c0_10 = arith.constant 0 : index
      %c0_11 = arith.constant 0 : index
      %17 = vector.load %arg3[%c0_10, %c0_11] : memref<8x32xf32, #tpu.memory_space<vmem>>, vector<8x32xf32>
      %c0_12 = arith.constant 0 : index
      %c0_13 = arith.constant 0 : index
      %18 = vector.load %arg16[%c0_12, %c0_13] : memref<8x32xf32, #tpu.memory_space<vmem>>, vector<8x32xf32>
      %c0_14 = arith.constant 0 : index
      %c0_15 = arith.constant 0 : index
      %19 = vector.load %arg4[%c0_14, %c0_15] : memref<32x128xf32, #tpu.memory_space<vmem>>, vector<32x128xf32>
      %c0_16 = arith.constant 0 : index
      %c0_17 = arith.constant 0 : index
      %20 = vector.load %arg5[%c0_16, %c0_17] : memref<32x128xf32, #tpu.memory_space<vmem>>, vector<32x128xf32>
      %c0_18 = arith.constant 0 : index
      %c0_19 = arith.constant 0 : index
      %21 = vector.load %arg6[%c0_18, %c0_19] : memref<1x128xf32, #tpu.memory_space<vmem>>, vector<1x128xf32>
      %c0_20 = arith.constant 0 : index
      %c0_21 = arith.constant 0 : index
      %22 = vector.load %arg7[%c0_20, %c0_21] : memref<128x128xf32, #tpu.memory_space<vmem>>, vector<128x128xf32>
      %c0_22 = arith.constant 0 : index
      %c0_23 = arith.constant 0 : index
      %23 = vector.load %arg8[%c0_22, %c0_23] : memref<1x128xf32, #tpu.memory_space<vmem>>, vector<1x128xf32>
      %c0_24 = arith.constant 0 : index
      %c0_25 = arith.constant 0 : index
      %24 = vector.load %arg9[%c0_24, %c0_25] : memref<128x128xf32, #tpu.memory_space<vmem>>, vector<128x128xf32>
      %c0_26 = arith.constant 0 : index
      %c0_27 = arith.constant 0 : index
      %25 = vector.load %arg10[%c0_26, %c0_27] : memref<1x128xf32, #tpu.memory_space<vmem>>, vector<1x128xf32>
      %c0_28 = arith.constant 0 : index
      %c0_29 = arith.constant 0 : index
      %26 = vector.load %arg11[%c0_28, %c0_29] : memref<1x128xf32, #tpu.memory_space<vmem>>, vector<1x128xf32>
      %c0_30 = arith.constant 0 : index
      %c0_31 = arith.constant 0 : index
      %27 = vector.load %arg12[%c0_30, %c0_31] : memref<1x128xf32, #tpu.memory_space<vmem>>, vector<1x128xf32>
      %c0_32 = arith.constant 0 : index
      %c0_33 = arith.constant 0 : index
      %28 = vector.load %arg13[%c0_32, %c0_33] : memref<128x32xf32, #tpu.memory_space<vmem>>, vector<128x32xf32>
      %c0_34 = arith.constant 0 : index
      %c0_35 = arith.constant 0 : index
      %29 = vector.load %arg14[%c0_34, %c0_35] : memref<1x32xf32, #tpu.memory_space<vmem>>, vector<1x32xf32>
      %cst_36 = arith.constant dense<0.000000e+00> : vector<8x128xf32>
      %30 = tpu.matmul %17, %19, %cst_36 {dimension_numbers = #tpu.dot_dimension_numbers<[1], [0], [0], [1], [0, 0, 1, 1], [], []>} : vector<8x32xf32>, vector<32x128xf32>, vector<8x128xf32> -> vector<8x128xf32>
      %cst_37 = arith.constant dense<0.000000e+00> : vector<8x128xf32>
      %31 = tpu.matmul %18, %20, %cst_37 {dimension_numbers = #tpu.dot_dimension_numbers<[1], [0], [0], [1], [0, 0, 1, 1], [], []>} : vector<8x32xf32>, vector<32x128xf32>, vector<8x128xf32> -> vector<8x128xf32>
      %32 = arith.addf %30, %31 : vector<8x128xf32>
      %33 = vector.broadcast %21 : vector<1x128xf32> to vector<8x128xf32>
      %34 = arith.addf %32, %33 : vector<8x128xf32>
      %cst_38 = arith.constant 0.000000e+00 : f32
      %35 = vector.broadcast %cst_38 : f32 to vector<8x128xf32>
      %36 = arith.maximumf %34, %35 : vector<8x128xf32>
      %cst_39 = arith.constant dense<0.000000e+00> : vector<8x128xf32>
      %37 = tpu.matmul %36, %22, %cst_39 {dimension_numbers = #tpu.dot_dimension_numbers<[1], [0], [0], [1], [0, 0, 1, 1], [], []>} : vector<8x128xf32>, vector<128x128xf32>, vector<8x128xf32> -> vector<8x128xf32>
      %38 = vector.broadcast %23 : vector<1x128xf32> to vector<8x128xf32>
      %39 = arith.addf %37, %38 : vector<8x128xf32>
      %cst_40 = arith.constant 0.000000e+00 : f32
      %40 = vector.broadcast %cst_40 : f32 to vector<8x128xf32>
      %41 = arith.maximumf %39, %40 : vector<8x128xf32>
      %cst_41 = arith.constant dense<0.000000e+00> : vector<8x128xf32>
      %42 = tpu.matmul %41, %24, %cst_41 {dimension_numbers = #tpu.dot_dimension_numbers<[1], [0], [0], [1], [0, 0, 1, 1], [], []>} : vector<8x128xf32>, vector<128x128xf32>, vector<8x128xf32> -> vector<8x128xf32>
      %43 = vector.broadcast %25 : vector<1x128xf32> to vector<8x128xf32>
      %44 = arith.addf %42, %43 : vector<8x128xf32>
      %cst_42 = arith.constant 0.000000e+00 : f32
      %45 = vector.broadcast %cst_42 : f32 to vector<8x128xf32>
      %46 = arith.maximumf %44, %45 : vector<8x128xf32>
      %47 = tpu.iota {dimensions = array<i32: 1>} : vector<1x128xi32>
      %c64_i32 = arith.constant 64 : i32
      %48 = vector.broadcast %c64_i32 : i32 to vector<1x128xi32>
      %49 = arith.cmpi slt, %47, %48 : vector<1x128xi32>
      %50 = arith.extui %49 : vector<1x128xi1> to vector<1x128xi32>
      %51 = arith.sitofp %50 : vector<1x128xi32> to vector<1x128xf32>
      %cst_43 = arith.constant dense<0.000000e+00> : vector<8xf32>
      %52 = vector.multi_reduction <add>, %46, %cst_43 [1] : vector<8x128xf32> to vector<8xf32>
      %53 = vector.shape_cast %52 : vector<8xf32> to vector<8x1xf32>
      %cst_44 = arith.constant 1.562500e-02 : f32
      %54 = vector.broadcast %cst_44 : f32 to vector<8x1xf32>
      %55 = arith.mulf %53, %54 : vector<8x1xf32>
      %56 = vector.broadcast %55 : vector<8x1xf32> to vector<8x128xf32>
      %57 = arith.subf %46, %56 : vector<8x128xf32>
      %58 = vector.broadcast %51 : vector<1x128xf32> to vector<8x128xf32>
      %59 = arith.mulf %57, %58 : vector<8x128xf32>
      %60 = arith.mulf %59, %59 : vector<8x128xf32>
      %cst_45 = arith.constant dense<0.000000e+00> : vector<8xf32>
      %61 = vector.multi_reduction <add>, %60, %cst_45 [1] : vector<8x128xf32> to vector<8xf32>
      %62 = vector.shape_cast %61 : vector<8xf32> to vector<8x1xf32>
      %cst_46 = arith.constant 1.562500e-02 : f32
      %63 = vector.broadcast %cst_46 : f32 to vector<8x1xf32>
      %64 = arith.mulf %62, %63 : vector<8x1xf32>
      %65 = vector.broadcast %55 : vector<8x1xf32> to vector<8x128xf32>
      %66 = arith.subf %46, %65 : vector<8x128xf32>
      %cst_47 = arith.constant 9.99999974E-6 : f32
      %67 = vector.broadcast %cst_47 : f32 to vector<8x1xf32>
      %68 = arith.addf %64, %67 : vector<8x1xf32>
      %69 = math.rsqrt %68 : vector<8x1xf32>
      %70 = vector.broadcast %69 : vector<8x1xf32> to vector<8x128xf32>
      %71 = arith.mulf %66, %70 : vector<8x128xf32>
      %72 = vector.broadcast %26 : vector<1x128xf32> to vector<8x128xf32>
      %73 = arith.mulf %71, %72 : vector<8x128xf32>
      %74 = vector.broadcast %27 : vector<1x128xf32> to vector<8x128xf32>
      %75 = arith.addf %73, %74 : vector<8x128xf32>
      %cst_48 = arith.constant dense<0.000000e+00> : vector<8x32xf32>
      %76 = tpu.matmul %75, %28, %cst_48 {dimension_numbers = #tpu.dot_dimension_numbers<[1], [0], [0], [1], [0, 0, 1, 1], [], []>} : vector<8x128xf32>, vector<128x32xf32>, vector<8x32xf32> -> vector<8x32xf32>
      %77 = vector.broadcast %29 : vector<1x32xf32> to vector<8x32xf32>
      %78 = arith.addf %76, %77 : vector<8x32xf32>
      %79 = arith.addf %17, %78 : vector<8x32xf32>
      %c0_49 = arith.constant 0 : index
      %c0_50 = arith.constant 0 : index
      %80 = vector.load %arg15[%c0_49, %c0_50] : memref<8x32xf32, #tpu.memory_space<vmem>>, vector<8x32xf32>
      tpu.vector_store %arg15[%c0_49, %c0_50], %79 {strides = array<i32>} : memref<8x32xf32, #tpu.memory_space<vmem>>, vector<8x32xf32>,
    } else {
    }
    return
  }
  func.func @transform_0(%arg0: i32) -> (i32, i32) {
    %c0_i32 = arith.constant 0 : i32
    %c0_i32_0 = arith.constant 0 : i32
    return %arg0, %c0_i32 : i32, i32
  }
  func.func @transform_1(%arg0: i32) -> (i32, i32) {
    %c0_i32 = arith.constant 0 : i32
    %c0_i32_0 = arith.constant 0 : i32
    return %c0_i32, %arg0 : i32, i32
  }
  func.func @transform_2(%arg0: i32) -> (i32, i32) {
    %c0_i32 = arith.constant 0 : i32
    %c0_i32_0 = arith.constant 0 : i32
    %c0_i32_1 = arith.constant 0 : i32
    return %c0_i32, %c0_i32_0 : i32, i32
  }
  func.func @transform_3(%arg0: i32) -> (i32, i32) {
    %c0_i32 = arith.constant 0 : i32
    %c0_i32_0 = arith.constant 0 : i32
    %c0_i32_1 = arith.constant 0 : i32
    return %c0_i32, %c0_i32_0 : i32, i32
  }
  func.func @transform_4(%arg0: i32) -> (i32, i32) {
    %c0_i32 = arith.constant 0 : i32
    %c0_i32_0 = arith.constant 0 : i32
    %c0_i32_1 = arith.constant 0 : i32
    return %c0_i32, %c0_i32_0 : i32, i32
  }
  func.func @transform_5(%arg0: i32) -> (i32, i32) {
    %c0_i32 = arith.constant 0 : i32
    %c0_i32_0 = arith.constant 0 : i32
    %c0_i32_1 = arith.constant 0 : i32
    return %c0_i32, %c0_i32_0 : i32, i32
  }
  func.func @transform_6(%arg0: i32) -> (i32, i32) {
    %c0_i32 = arith.constant 0 : i32
    %c0_i32_0 = arith.constant 0 : i32
    %c0_i32_1 = arith.constant 0 : i32
    return %c0_i32, %c0_i32_0 : i32, i32
  }
  func.func @transform_7(%arg0: i32) -> (i32, i32) {
    %c0_i32 = arith.constant 0 : i32
    %c0_i32_0 = arith.constant 0 : i32
    %c0_i32_1 = arith.constant 0 : i32
    return %c0_i32, %c0_i32_0 : i32, i32
  }
  func.func @transform_8(%arg0: i32) -> (i32, i32) {
    %c0_i32 = arith.constant 0 : i32
    %c0_i32_0 = arith.constant 0 : i32
    %c0_i32_1 = arith.constant 0 : i32
    return %c0_i32, %c0_i32_0 : i32, i32
  }
  func.func @transform_9(%arg0: i32) -> (i32, i32) {
    %c0_i32 = arith.constant 0 : i32
    %c0_i32_0 = arith.constant 0 : i32
    %c0_i32_1 = arith.constant 0 : i32
    return %c0_i32, %c0_i32_0 : i32, i32
  }
  func.func @transform_10(%arg0: i32) -> (i32, i32) {
    %c0_i32 = arith.constant 0 : i32
    %c0_i32_0 = arith.constant 0 : i32
    %c0_i32_1 = arith.constant 0 : i32
    return %c0_i32, %c0_i32_0 : i32, i32
  }
  func.func @transform_11(%arg0: i32) -> (i32, i32) {
    %c0_i32 = arith.constant 0 : i32
    %c0_i32_0 = arith.constant 0 : i32
    %c0_i32_1 = arith.constant 0 : i32
    return %c0_i32, %c0_i32_0 : i32, i32
  }
  func.func @transform_12(%arg0: i32) -> (i32, i32) {
    %c0_i32 = arith.constant 0 : i32
    %c0_i32_0 = arith.constant 0 : i32
    %c0_i32_1 = arith.constant 0 : i32
    return %c0_i32, %c0_i32_0 : i32, i32
  }
  func.func @transform_13(%arg0: i32) -> (i32, i32) {
    %c0_i32 = arith.constant 0 : i32
    %c0_i32_0 = arith.constant 0 : i32
    %c0_i32_1 = arith.constant 0 : i32
    return %c0_i32, %c0_i32_0 : i32, i32
  }
  func.func @transform_14(%arg0: i32) -> (i32, i32) {
    %c0_i32 = arith.constant 0 : i32
    %c0_i32_0 = arith.constant 0 : i32
    %c0_i32_1 = arith.constant 0 : i32
    return %c0_i32, %c0_i32_0 : i32, i32
  }
}

</mosaic_0001>

<llo_original>
// kernel: tpu_custom_call.1
$region0: #{tpu_custom_call.1}
  #allocation0 [shape = 'u32[]', space=smem, size = 0x4, offset = 0x4, fixed_abs, tag = 'smem constant byte address 0x4 - core index']
  #allocation1 [shape = 'u32[144,128]{1,0:T(1,128)}', space=vmem, size = 0x12000, scoped, tag = 'internal scratch']
  #allocation2 [shape = 'f32[8,32]{1,0:T(8,128)}', space=vmem, size = 0x1000, scoped, tag = 'scratch operand']
  %s0 = inlined_call_operand.vmem [shape: f32[8,32], index: 0, kind: input, shape index: {}]
  %s1 = inlined_call_operand.vmem [shape: s32[1,8], index: 1, kind: input, shape index: {}]
  %s2 = inlined_call_operand.hbm [shape: f32[8,32], index: 2, kind: input, shape index: {}, may-alias: {2,14}]
  %s3 = inlined_call_operand.vmem [shape: f32[32,128], index: 3, kind: input, shape index: {}]
  %s4 = inlined_call_operand.vmem [shape: f32[32,128], index: 4, kind: input, shape index: {}]
  %s5 = inlined_call_operand.vmem [shape: f32[1,128], index: 5, kind: input, shape index: {}]
  %s6 = inlined_call_operand.vmem [shape: f32[128,128], index: 6, kind: input, shape index: {}]
  %s7 = inlined_call_operand.hbm [shape: f32[1,128], index: 7, kind: input, shape index: {}]
  %s8 = inlined_call_operand.hbm [shape: f32[128,128], index: 8, kind: input, shape index: {}]
  %s9 = inlined_call_operand.hbm [shape: f32[1,128], index: 9, kind: input, shape index: {}]
  %s10 = inlined_call_operand.hbm [shape: f32[1,128], index: 10, kind: input, shape index: {}]
  %s11 = inlined_call_operand.hbm [shape: f32[1,128], index: 11, kind: input, shape index: {}]
  %s12 = inlined_call_operand.vmem [shape: f32[128,32], index: 12, kind: input, shape index: {}]
  %s13 = inlined_call_operand.hbm [shape: f32[1,32], index: 13, kind: input, shape index: {}]
  %s14 = inlined_call_operand.hbm [shape: f32[8,32], index: 14, kind: output, shape index: {}, may-alias: {2,14}]
  %s15 = sld [smem:[#allocation0]]
  $region102: #{tpu_custom_call.1} parent=0
    _
  %s17 = ssub.s32 1, %s15
  %s18 = scalar_select 0, %s17, %s15
  $region1: #{tpu_custom_call.1} parent=0
    #allocation3 [shape = 'u8[4096]{0}', space=vmem, size = 0x1000, scoped, tag = 'input window, operand 2, single buffered']
    #allocation4 [shape = 's32[1]{0}', space=sflag, size = 0x4, scoped, tag = 'scoped memory for tpu_custom_call.1']
    #allocation5 [shape = 's32[1]{0}', space=sflag, size = 0x4, scoped, tag = 'scoped memory for tpu_custom_call.1']
    #allocation6 [shape = 'u8[512]{0}', space=vmem, size = 0x400, scoped, tag = 'input window, operand 7, single buffered']
    #allocation7 [shape = 's32[1]{0}', space=sflag, size = 0x4, scoped, tag = 'scoped memory for tpu_custom_call.1']
    #allocation8 [shape = 'u8[65536]{0}', space=vmem, size = 0x10000, scoped, tag = 'input window, operand 8, single buffered']
    #allocation9 [shape = 'u8[512]{0}', space=vmem, size = 0x400, scoped, tag = 'input window, operand 9, single buffered']
    #allocation10 [shape = 's32[1]{0}', space=sflag, size = 0x4, scoped, tag = 'scoped memory for tpu_custom_call.1']
    #allocation11 [shape = 'u8[512]{0}', space=vmem, size = 0x400, scoped, tag = 'input window, operand 10, single buffered']
    #allocation12 [shape = 'u8[512]{0}', space=vmem, size = 0x400, scoped, tag = 'input window, operand 11, single buffered']
    #allocation13 [shape = 's32[1]{0}', space=sflag, size = 0x4, scoped, tag = 'scoped memory for tpu_custom_call.1']
    #allocation14 [shape = 'u8[512]{0}', space=vmem, size = 0x400, scoped, tag = 'input window, operand 13, single buffered']
    #allocation15 [shape = 'u8[4096]{0}', space=vmem, size = 0x1000, scoped, tag = 'output window, operand 0, single buffered']
    %19 = vsyncpa [#allocation4], 0
    %20 = vsyncpa [#allocation7], 0
    %21 = vsyncpa [#allocation10], 0
    %22 = vsyncpa [#allocation13], 0
    %23 = vsyncpa [#allocation5], 0
    // Predicated region
    $region2: #{tpu_custom_call.1} parent=1 // pred_check
      _
    $region3: #{tpu_custom_call.1} parent=1 // pred_check_branch
      %25 = sbr.rel (0) target = $region5
    $region4: #{tpu_custom_call.1} parent=1 // pred_region
      _
    $region5: #{tpu_custom_call.1} parent=1 // pred_fallthru
      _
    // Predicated region
    $region6: #{tpu_custom_call.1} parent=1 // pred_check
      _
    $region7: #{tpu_custom_call.1} parent=1 // pred_check_branch
      %27 = sbr.rel (0) target = $region9
    $region8: #{tpu_custom_call.1} parent=1 // pred_region
      _
    $region9: #{tpu_custom_call.1} parent=1 // pred_fallthru
      _
    // Predicated region
    $region10: #{tpu_custom_call.1} parent=1 // pred_check
      _
    $region11: #{tpu_custom_call.1} parent=1 // pred_check_branch
      %29 = sbr.rel (0) target = $region13
    $region12: #{tpu_custom_call.1} parent=1 // pred_region
      %s31 = ssub.s32 128, 128
      %32 = vsyncadd [#allocation4], %s31
      %s34 = sshll.u32 [#allocation3], 4
      %s35 = int_to_ptr.vmem [resolvable:$true] %s34
      %37 = dma.hbm_to_vmem [thread:$0]  %s2, 128, %s35, [#allocation4]
    $region13: #{tpu_custom_call.1} parent=1 // pred_fallthru
      _
    // Predicated region
    $region14: #{tpu_custom_call.1} parent=1 // pred_check
      _
    $region15: #{tpu_custom_call.1} parent=1 // pred_check_branch
      %39 = sbr.rel (0) target = $region17
    $region16: #{tpu_custom_call.1} parent=1 // pred_region
      _
    $region17: #{tpu_custom_call.1} parent=1 // pred_fallthru
      _
    // Predicated region
    $region18: #{tpu_custom_call.1} parent=1 // pred_check
      _
    $region19: #{tpu_custom_call.1} parent=1 // pred_check_branch
      %41 = sbr.rel (0) target = $region21
    $region20: #{tpu_custom_call.1} parent=1 // pred_region
      _
    $region21: #{tpu_custom_call.1} parent=1 // pred_fallthru
      _
    // Predicated region
    $region22: #{tpu_custom_call.1} parent=1 // pred_check
      _
    $region23: #{tpu_custom_call.1} parent=1 // pred_check_branch
      %43 = sbr.rel (0) target = $region25
    $region24: #{tpu_custom_call.1} parent=1 // pred_region
      _
    $region25: #{tpu_custom_call.1} parent=1 // pred_fallthru
      _
    // Predicated region
    $region26: #{tpu_custom_call.1} parent=1 // pred_check
      _
    $region27: #{tpu_custom_call.1} parent=1 // pred_check_branch
      %45 = sbr.rel (0) target = $region29
    $region28: #{tpu_custom_call.1} parent=1 // pred_region
      _
    $region29: #{tpu_custom_call.1} parent=1 // pred_fallthru
      _
    // Predicated region
    $region30: #{tpu_custom_call.1} parent=1 // pred_check
      _
    $region31: #{tpu_custom_call.1} parent=1 // pred_check_branch
      %47 = sbr.rel (0) target = $region33
    $region32: #{tpu_custom_call.1} parent=1 // pred_region
      %s49 = ssub.s32 16, 16
      %50 = vsyncadd [#allocation7], %s49
      %s52 = sshll.u32 [#allocation6], 4
      %s53 = int_to_ptr.vmem [resolvable:$true] %s52
      %55 = dma.hbm_to_vmem [thread:$0]  %s7, 16, %s53, [#allocation7]
    $region33: #{tpu_custom_call.1} parent=1 // pred_fallthru
      _
    // Predicated region
    $region34: #{tpu_custom_call.1} parent=1 // pred_check
      _
    $region35: #{tpu_custom_call.1} parent=1 // pred_check_branch
      %57 = sbr.rel (0) target = $region37
    $region36: #{tpu_custom_call.1} parent=1 // pred_region
      %s59 = ssub.s32 2048, 2048
      %60 = vsyncadd [#allocation7], %s59
      %s61 = sshll.u32 [#allocation8], 4
      %s62 = int_to_ptr.vmem [resolvable:$true] %s61
      %67 = dma.hbm_to_vmem [thread:$0]  %s8, 2048, %s62, [#allocation7], 128, 128, 8
    $region37: #{tpu_custom_call.1} parent=1 // pred_fallthru
      _
    // Predicated region
    $region38: #{tpu_custom_call.1} parent=1 // pred_check
      _
    $region39: #{tpu_custom_call.1} parent=1 // pred_check_branch
      %69 = sbr.rel (0) target = $region41
    $region40: #{tpu_custom_call.1} parent=1 // pred_region
      %s71 = ssub.s32 16, 16
      %72 = vsyncadd [#allocation10], %s71
      %s74 = sshll.u32 [#allocation9], 4
      %s75 = int_to_ptr.vmem [resolvable:$true] %s74
      %77 = dma.hbm_to_vmem [thread:$0]  %s9, 16, %s75, [#allocation10]
    $region41: #{tpu_custom_call.1} parent=1 // pred_fallthru
      _
    // Predicated region
    $region42: #{tpu_custom_call.1} parent=1 // pred_check
      _
    $region43: #{tpu_custom_call.1} parent=1 // pred_check_branch
      %79 = sbr.rel (0) target = $region45
    $region44: #{tpu_custom_call.1} parent=1 // pred_region
      %s81 = ssub.s32 16, 16
      %82 = vsyncadd [#allocation10], %s81
      %s84 = sshll.u32 [#allocation11], 4
      %s85 = int_to_ptr.vmem [resolvable:$true] %s84
      %87 = dma.hbm_to_vmem [thread:$0]  %s10, 16, %s85, [#allocation10]
    $region45: #{tpu_custom_call.1} parent=1 // pred_fallthru
      _
    // Predicated region
    $region46: #{tpu_custom_call.1} parent=1 // pred_check
      _
    $region47: #{tpu_custom_call.1} parent=1 // pred_check_branch
      %89 = sbr.rel (0) target = $region49
    $region48: #{tpu_custom_call.1} parent=1 // pred_region
      %s91 = ssub.s32 16, 16
      %92 = vsyncadd [#allocation13], %s91
      %s94 = sshll.u32 [#allocation12], 4
      %s95 = int_to_ptr.vmem [resolvable:$true] %s94
      %97 = dma.hbm_to_vmem [thread:$0]  %s11, 16, %s95, [#allocation13]
    $region49: #{tpu_custom_call.1} parent=1 // pred_fallthru
      _
    // Predicated region
    $region50: #{tpu_custom_call.1} parent=1 // pred_check
      _
    $region51: #{tpu_custom_call.1} parent=1 // pred_check_branch
      %99 = sbr.rel (0) target = $region53
    $region52: #{tpu_custom_call.1} parent=1 // pred_region
      _
    $region53: #{tpu_custom_call.1} parent=1 // pred_fallthru
      _
    // Predicated region
    $region54: #{tpu_custom_call.1} parent=1 // pred_check
      _
    $region55: #{tpu_custom_call.1} parent=1 // pred_check_branch
      %101 = sbr.rel (0) target = $region57
    $region56: #{tpu_custom_call.1} parent=1 // pred_region
      %s103 = ssub.s32 16, 16
      %104 = vsyncadd [#allocation13], %s103
      %s106 = sshll.u32 [#allocation14], 4
      %s107 = int_to_ptr.vmem [resolvable:$true] %s106
      %109 = dma.hbm_to_vmem [thread:$0]  %s13, 16, %s107, [#allocation13]
    $region57: #{tpu_custom_call.1} parent=1 // pred_fallthru
      _
    // Predicated region
    $region58: #{tpu_custom_call.1} parent=1 // pred_check
      _
    $region59: #{tpu_custom_call.1} parent=1 // pred_check_branch
      %111 = sbr.rel (0) target = $region61
    $region60: #{tpu_custom_call.1} parent=1 // pred_region
      %112 = dma.done [#allocation4], 128
    $region61: #{tpu_custom_call.1} parent=1 // pred_fallthru
      _
    // Predicated region
    $region62: #{tpu_custom_call.1} parent=1 // pred_check
      _
    $region63: #{tpu_custom_call.1} parent=1 // pred_check_branch
      %114 = sbr.rel (0) target = $region65
    $region64: #{tpu_custom_call.1} parent=1 // pred_region
      %115 = dma.done [#allocation7], 16
    $region65: #{tpu_custom_call.1} parent=1 // pred_fallthru
      _
    // Predicated region
    $region66: #{tpu_custom_call.1} parent=1 // pred_check
      _
    $region67: #{tpu_custom_call.1} parent=1 // pred_check_branch
      %117 = sbr.rel (0) target = $region69
    $region68: #{tpu_custom_call.1} parent=1 // pred_region
      %118 = dma.done [#allocation7], 2048
    $region69: #{tpu_custom_call.1} parent=1 // pred_fallthru
      _
    // Predicated region
    $region70: #{tpu_custom_call.1} parent=1 // pred_check
      _
    $region71: #{tpu_custom_call.1} parent=1 // pred_check_branch
      %120 = sbr.rel (0) target = $region73
    $region72: #{tpu_custom_call.1} parent=1 // pred_region
      %121 = dma.done [#allocation10], 16
    $region73: #{tpu_custom_call.1} parent=1 // pred_fallthru
      _
    // Predicated region
    $region74: #{tpu_custom_call.1} parent=1 // pred_check
      _
    $region75: #{tpu_custom_call.1} parent=1 // pred_check_branch
      %123 = sbr.rel (0) target = $region77
    $region76: #{tpu_custom_call.1} parent=1 // pred_region
      %124 = dma.done [#allocation10], 16
    $region77: #{tpu_custom_call.1} parent=1 // pred_fallthru
      _
    // Predicated region
    $region78: #{tpu_custom_call.1} parent=1 // pred_check
      _
    $region79: #{tpu_custom_call.1} parent=1 // pred_check_branch
      %126 = sbr.rel (0) target = $region81
    $region80: #{tpu_custom_call.1} parent=1 // pred_region
      %127 = dma.done [#allocation13], 16
    $region81: #{tpu_custom_call.1} parent=1 // pred_fallthru
      _
    // Predicated region
    $region82: #{tpu_custom_call.1} parent=1 // pred_check
      _
    $region83: #{tpu_custom_call.1} parent=1 // pred_check_branch
      %129 = sbr.rel (0) target = $region85
    $region84: #{tpu_custom_call.1} parent=1 // pred_region
      %130 = dma.done [#allocation13], 16
    $region85: #{tpu_custom_call.1} parent=1 // pred_fallthru
      _
    %p131 = scmp.eq.s32.totalorder 0, 0
    // Predicated region
    $region86: #{tpu_custom_call.1} parent=1 // pred_check
      %p132 = pneg %p131
    $region87: #{tpu_custom_call.1} parent=1 // pred_check_branch
      %134 = sbr.rel (%p132) target = $region89
    $region88: #{tpu_custom_call.1} parent=1 // pred_region
      %vm135 = vcmask 261120
      %136 = vst.msk [vmem:[#allocation2] sm:$0xff] %vm135, 0.0
    $region89: #{tpu_custom_call.1} parent=1 // pred_fallthru
      _
    %v137 = vld [vmem:[#allocation2] sm:$0xff]
    %v138 = vld [vmem:[%s0] sm:$0xff]
    %v139 = vld [vmem:[%s1] sm:$0x1]
    %v140 = vlaneseq
    %v141 = vshrl.u32 %v140, 7
    %v142 = vlaneseq
    %v143 = vshrl.u32 %v142, 7
    %v144 = vsub.s32 0, %v143
    %v145 = vrot.slane %v139, %v144
    %vm146 = vcmp.eq.s32.totalorder %v141, %v145
    %v147 = vsel %vm146, 1, 0
    %v148 = vcvt.s32.f32 %v147
    %vm149 = vcmask 64512
    %v151 = vsel %vm149, %v148, 0
    %153 = vmatprep.subr.mxu0 0.0
    %v154 = vand.u32 %v138, 4294901760
    %155 = vmatpush1.msra.mxu0 %v154
    %156 = vmatprep.subr.mxu0 0.0
    %157 = vmatpush1.msra.mxu0 0.0
    %158 = vmatprep.subr.mxu0 0.0
    %159 = vmatpush1.msra.mxu0 0.0
    %160 = vmatprep.subr.mxu0 0.0
    %161 = vmatpush1.msra.mxu0 0.0
    %162 = vmatprep.subr.mxu0 0.0
    %163 = vmatpush1.msra.mxu0 0.0
    %164 = vmatprep.subr.mxu0 0.0
    %165 = vmatpush1.msra.mxu0 0.0
    %166 = vmatprep.subr.mxu0 0.0
    %167 = vmatpush1.msra.mxu0 0.0
    %168 = vmatprep.subr.mxu0 0.0
    %169 = vmatpush1.msra.mxu0 0.0
    %170 = vmatprep.subr.mxu0 0.0
    %171 = vmatpush1.msra.mxu0 0.0
    %172 = vmatprep.subr.mxu0 0.0
    %173 = vmatpush1.msra.mxu0 0.0
    %174 = vmatprep.subr.mxu0 0.0
    %175 = vmatpush1.msra.mxu0 0.0
    %176 = vmatprep.subr.mxu0 0.0
    %177 = vmatpush1.msra.mxu0 0.0
    %178 = vmatprep.subr.mxu0 0.0
    %179 = vmatpush1.msra.mxu0 0.0
    %180 = vmatprep.subr.mxu0 0.0
    %181 = vmatpush1.msra.mxu0 0.0
    %182 = vmatprep.subr.mxu0 0.0
    %183 = vmatpush1.msra.mxu0 0.0
    %184 = vmatprep.subr.mxu0 0.0
    %185 = vmatpush1.msra.mxu0 0.0
    %186 = vmatprep.subr.mxu0 0.0
    %187 = vmatpush1.msra.mxu0 0.0
    %188 = vmatprep.subr.mxu0 0.0
    %189 = vmatpush1.msra.mxu0 0.0
    %190 = vmatprep.subr.mxu0 0.0
    %191 = vmatpush1.msra.mxu0 0.0
    %192 = vmatprep.subr.mxu0 0.0
    %193 = vmatpush1.msra.mxu0 0.0
    %194 = vmatprep.subr.mxu0 0.0
    %195 = vmatpush1.msra.mxu0 0.0
    %196 = vmatprep.subr.mxu0 0.0
    %197 = vmatpush1.msra.mxu0 0.0
    %198 = vmatprep.subr.mxu0 0.0
    %199 = vmatpush1.msra.mxu0 0.0
    %200 = vmatprep.subr.mxu0 0.0
    %201 = vmatpush1.msra.mxu0 0.0
    %202 = vmatprep.subr.mxu0 0.0
    %203 = vmatpush1.msra.mxu0 0.0
    %204 = vmatprep.subr.mxu0 0.0
    %205 = vmatpush1.msra.mxu0 0.0
    %206 = vmatprep.subr.mxu0 0.0
    %207 = vmatpush1.msra.mxu0 0.0
    %208 = vmatprep.subr.mxu0 0.0
    %209 = vmatpush1.msra.mxu0 0.0
    %210 = vmatprep.subr.mxu0 0.0
    %211 = vmatpush1.msra.mxu0 0.0
    %212 = vmatprep.subr.mxu0 0.0
    %213 = vmatpush1.msra.mxu0 0.0
    %214 = vmatprep.subr.mxu0 0.0
    %215 = vmatpush1.msra.mxu0 0.0
    %216 = vmatprep.subr.mxu0 0.0
    %217 = vmatpush1.msra.mxu0 0.0
    %218 = vmatprep.mubr.f32.mxu0 0.0
    %v219 = vand.u32 %v151, 4294901760
    %v220 = vsub.f32 %v151, %v219
    %v221 = vand.u32 %v220, 4294901760
    %v222 = vsub.f32 %v220, %v221
    %v223 = vand.u32 %v222, 4294901760
    %224 = vmatmul.mubr.f32.gmra.mrb[0].mxu0 %v223
    %v225 = vpop.f32.mrb[0].mxu0
    %v226 = vadd.f32 0.0, %v225
    %v227 = vpop.f32.mrb[0].mxu0
    %228 = vdwg.mxu0
    %229 = vmatprep.subr.mxu0 0.0
    %v230 = vand.u32 %v138, 4294901760
    %v231 = vsub.f32 %v138, %v230
    %v232 = vand.u32 %v231, 4294901760
    %v233 = vsub.f32 %v231, %v232
    %v234 = vand.u32 %v233, 4294901760
    %235 = vmatpush1.msra.mxu0 %v234
    %236 = vmatprep.subr.mxu0 0.0
    %237 = vmatpush1.msra.mxu0 0.0
    %238 = vmatprep.subr.mxu0 0.0
    %239 = vmatpush1.msra.mxu0 0.0
    %240 = vmatprep.subr.mxu0 0.0
    %241 = vmatpush1.msra.mxu0 0.0
    %242 = vmatprep.subr.mxu0 0.0
    %243 = vmatpush1.msra.mxu0 0.0
    %244 = vmatprep.subr.mxu0 0.0
    %245 = vmatpush1.msra.mxu0 0.0
    %246 = vmatprep.subr.mxu0 0.0
    %247 = vmatpush1.msra.mxu0 0.0
    %248 = vmatprep.subr.mxu0 0.0
    %249 = vmatpush1.msra.mxu0 0.0
    %250 = vmatprep.subr.mxu0 0.0
    %251 = vmatpush1.msra.mxu0 0.0
    %252 = vmatprep.subr.mxu0 0.0
    %253 = vmatpush1.msra.mxu0 0.0
    %254 = vmatprep.subr.mxu0 0.0
    %255 = vmatpush1.msra.mxu0 0.0
    %256 = vmatprep.subr.mxu0 0.0
    %257 = vmatpush1.msra.mxu0 0.0
    %258 = vmatprep.subr.mxu0 0.0
    %259 = vmatpush1.msra.mxu0 0.0
    %260 = vmatprep.subr.mxu0 0.0
    %261 = vmatpush1.msra.mxu0 0.0
    %262 = vmatprep.subr.mxu0 0.0
    %263 = vmatpush1.msra.mxu0 0.0
    %264 = vmatprep.subr.mxu0 0.0
    %265 = vmatpush1.msra.mxu0 0.0
    %266 = vmatprep.subr.mxu0 0.0
    %267 = vmatpush1.msra.mxu0 0.0
    %268 = vmatprep.subr.mxu0 0.0
    %269 = vmatpush1.msra.mxu0 0.0
    %270 = vmatprep.subr.mxu0 0.0
    %271 = vmatpush1.msra.mxu0 0.0
    %272 = vmatprep.subr.mxu0 0.0
    %273 = vmatpush1.msra.mxu0 0.0
    %274 = vmatprep.subr.mxu0 0.0
    %275 = vmatpush1.msra.mxu0 0.0
    %276 = vmatprep.subr.mxu0 0.0
    %277 = vmatpush1.msra.mxu0 0.0
    %278 = vmatprep.subr.mxu0 0.0
    %279 = vmatpush1.msra.mxu0 0.0
    %280 = vmatprep.subr.mxu0 0.0
    %281 = vmatpush1.msra.mxu0 0.0
    %282 = vmatprep.subr.mxu0 0.0
    %283 = vmatpush1.msra.mxu0 0.0
    %284 = vmatprep.subr.mxu0 0.0
    %285 = vmatpush1.msra.mxu0 0.0
    %286 = vmatprep.subr.mxu0 0.0
    %287 = vmatpush1.msra.mxu0 0.0
    %288 = vmatprep.subr.mxu0 0.0
    %289 = vmatpush1.msra.mxu0 0.0
    %290 = vmatprep.subr.mxu0 0.0
    %291 = vmatpush1.msra.mxu0 0.0
    %292 = vmatprep.subr.mxu0 0.0
    %293 = vmatpush1.msra.mxu0 0.0
    %294 = vmatprep.subr.mxu0 0.0
    %295 = vmatpush1.msra.mxu0 0.0
    %296 = vmatprep.subr.mxu0 0.0
    %297 = vmatpush1.msra.mxu0 0.0
    %298 = vmatprep.mubr.f32.mxu0 0.0
    %v299 = vand.u32 %v151, 4294901760
    %300 = vmatmul.mubr.f32.gmra.mrb[0].mxu0 %v299
    %v301 = vpop.f32.mrb[0].mxu0
    %v302 = vadd.f32 %v226, %v301
    %v303 = vpop.f32.mrb[0].mxu0
    %304 = vdwg.mxu0
    %305 = vmatprep.subr.mxu0 0.0
    %v306 = vand.u32 %v138, 4294901760
    %v307 = vsub.f32 %v138, %v306
    %308 = vmatpush1.msra.mxu0 %v307
    %309 = vmatprep.subr.mxu0 0.0
    %310 = vmatpush1.msra.mxu0 0.0
    %311 = vmatprep.subr.mxu0 0.0
    %312 = vmatpush1.msra.mxu0 0.0
    %313 = vmatprep.subr.mxu0 0.0
    %314 = vmatpush1.msra.mxu0 0.0
    %315 = vmatprep.subr.mxu0 0.0
    %316 = vmatpush1.msra.mxu0 0.0
    %317 = vmatprep.subr.mxu0 0.0
    %318 = vmatpush1.msra.mxu0 0.0
    %319 = vmatprep.subr.mxu0 0.0
    %320 = vmatpush1.msra.mxu0 0.0
    %321 = vmatprep.subr.mxu0 0.0
    %322 = vmatpush1.msra.mxu0 0.0
    %323 = vmatprep.subr.mxu0 0.0
    %324 = vmatpush1.msra.mxu0 0.0
    %325 = vmatprep.subr.mxu0 0.0
    %326 = vmatpush1.msra.mxu0 0.0
    %327 = vmatprep.subr.mxu0 0.0
    %328 = vmatpush1.msra.mxu0 0.0
    %329 = vmatprep.subr.mxu0 0.0
    %330 = vmatpush1.msra.mxu0 0.0
    %331 = vmatprep.subr.mxu0 0.0
    %332 = vmatpush1.msra.mxu0 0.0
    %333 = vmatprep.subr.mxu0 0.0
    %334 = vmatpush1.msra.mxu0 0.0
    %335 = vmatprep.subr.mxu0 0.0
    %336 = vmatpush1.msra.mxu0 0.0
    %337 = vmatprep.subr.mxu0 0.0
    %338 = vmatpush1.msra.mxu0 0.0
    %339 = vmatprep.subr.mxu0 0.0
    %340 = vmatpush1.msra.mxu0 0.0
    %341 = vmatprep.subr.mxu0 0.0
    %342 = vmatpush1.msra.mxu0 0.0
    %343 = vmatprep.subr.mxu0 0.0
    %344 = vmatpush1.msra.mxu0 0.0
    %345 = vmatprep.subr.mxu0 0.0
    %346 = vmatpush1.msra.mxu0 0.0
    %347 = vmatprep.subr.mxu0 0.0
    %348 = vmatpush1.msra.mxu0 0.0
    %349 = vmatprep.subr.mxu0 0.0
    %350 = vmatpush1.msra.mxu0 0.0
    %351 = vmatprep.subr.mxu0 0.0
    %352 = vmatpush1.msra.mxu0 0.0
    %353 = vmatprep.subr.mxu0 0.0
    %354 = vmatpush1.msra.mxu0 0.0
    %355 = vmatprep.subr.mxu0 0.0
    %356 = vmatpush1.msra.mxu0 0.0
    %357 = vmatprep.subr.mxu0 0.0
    %358 = vmatpush1.msra.mxu0 0.0
    %359 = vmatprep.subr.mxu0 0.0
    %360 = vmatpush1.msra.mxu0 0.0
    %361 = vmatprep.subr.mxu0 0.0
    %362 = vmatpush1.msra.mxu0 0.0
    %363 = vmatprep.subr.mxu0 0.0
    %364 = vmatpush1.msra.mxu0 0.0
    %365 = vmatprep.subr.mxu0 0.0
    %366 = vmatpush1.msra.mxu0 0.0
    %367 = vmatprep.subr.mxu0 0.0
    %368 = vmatpush1.msra.mxu0 0.0
    %369 = vmatprep.subr.mxu0 0.0
    %370 = vmatpush1.msra.mxu0 0.0
    %371 = vmatprep.mubr.f32.mxu0 0.0
    %v372 = vand.u32 %v151, 4294901760
    %v373 = vsub.f32 %v151, %v372
    %374 = vmatmul.mubr.f32.gmra.mrb[0].mxu0 %v373
    %v375 = vpop.f32.mrb[0].mxu0
    %v376 = vadd.f32 %v302, %v375
    %v377 = vpop.f32.mrb[0].mxu0
    %378 = vdwg.mxu0
    %379 = vmatprep.subr.mxu0 0.0
    %v380 = vand.u32 %v138, 4294901760
    %381 = vmatpush1.msra.mxu0 %v380
    %382 = vmatprep.subr.mxu0 0.0
    %383 = vmatpush1.msra.mxu0 0.0
    %384 = vmatprep.subr.mxu0 0.0
    %385 = vmatpush1.msra.mxu0 0.0
    %386 = vmatprep.subr.mxu0 0.0
    %387 = vmatpush1.msra.mxu0 0.0
    %388 = vmatprep.subr.mxu0 0.0
    %389 = vmatpush1.msra.mxu0 0.0
    %390 = vmatprep.subr.mxu0 0.0
    %391 = vmatpush1.msra.mxu0 0.0
    %392 = vmatprep.subr.mxu0 0.0
    %393 = vmatpush1.msra.mxu0 0.0
    %394 = vmatprep.subr.mxu0 0.0
    %395 = vmatpush1.msra.mxu0 0.0
    %396 = vmatprep.subr.mxu0 0.0
    %397 = vmatpush1.msra.mxu0 0.0
    %398 = vmatprep.subr.mxu0 0.0
    %399 = vmatpush1.msra.mxu0 0.0
    %400 = vmatprep.subr.mxu0 0.0
    %401 = vmatpush1.msra.mxu0 0.0
    %402 = vmatprep.subr.mxu0 0.0
    %403 = vmatpush1.msra.mxu0 0.0
    %404 = vmatprep.subr.mxu0 0.0
    %405 = vmatpush1.msra.mxu0 0.0
    %406 = vmatprep.subr.mxu0 0.0
    %407 = vmatpush1.msra.mxu0 0.0
    %408 = vmatprep.subr.mxu0 0.0
    %409 = vmatpush1.msra.mxu0 0.0
    %410 = vmatprep.subr.mxu0 0.0
    %411 = vmatpush1.msra.mxu0 0.0
    %412 = vmatprep.subr.mxu0 0.0
    %413 = vmatpush1.msra.mxu0 0.0
    %414 = vmatprep.subr.mxu0 0.0
    %415 = vmatpush1.msra.mxu0 0.0
    %416 = vmatprep.subr.mxu0 0.0
    %417 = vmatpush1.msra.mxu0 0.0
    %418 = vmatprep.subr.mxu0 0.0
    %419 = vmatpush1.msra.mxu0 0.0
    %420 = vmatprep.subr.mxu0 0.0
    %421 = vmatpush1.msra.mxu0 0.0
    %422 = vmatprep.subr.mxu0 0.0
    %423 = vmatpush1.msra.mxu0 0.0
    %424 = vmatprep.subr.mxu0 0.0
    %425 = vmatpush1.msra.mxu0 0.0
    %426 = vmatprep.subr.mxu0 0.0
    %427 = vmatpush1.msra.mxu0 0.0
    %428 = vmatprep.subr.mxu0 0.0
    %429 = vmatpush1.msra.mxu0 0.0
    %430 = vmatprep.subr.mxu0 0.0
    %431 = vmatpush1.msra.mxu0 0.0
    %432 = vmatprep.subr.mxu0 0.0
    %433 = vmatpush1.msra.mxu0 0.0
    %434 = vmatprep.subr.mxu0 0.0
    %435 = vmatpush1.msra.mxu0 0.0
    %436 = vmatprep.subr.mxu0 0.0
    %437 = vmatpush1.msra.mxu0 0.0
    %438 = vmatprep.subr.mxu0 0.0
    %439 = vmatpush1.msra.mxu0 0.0
    %440 = vmatprep.subr.mxu0 0.0
    %441 = vmatpush1.msra.mxu0 0.0
    %442 = vmatprep.subr.mxu0 0.0
    %443 = vmatpush1.msra.mxu0 0.0
    %444 = vmatprep.mubr.f32.mxu0 0.0
    %v445 = vand.u32 %v151, 4294901760
    %v446 = vsub.f32 %v151, %v445
    %v447 = vand.u32 %v446, 4294901760
    %448 = vmatmul.mubr.f32.gmra.mrb[0].mxu0 %v447
    %v449 = vpop.f32.mrb[0].mxu0
    %v450 = vadd.f32 %v376, %v449
    %v451 = vpop.f32.mrb[0].mxu0
    %452 = vdwg.mxu0
    %453 = vmatprep.subr.mxu0 0.0
    %v454 = vand.u32 %v138, 4294901760
    %v455 = vsub.f32 %v138, %v454
    %v456 = vand.u32 %v455, 4294901760
    %457 = vmatpush1.msra.mxu0 %v456
    %458 = vmatprep.subr.mxu0 0.0
    %459 = vmatpush1.msra.mxu0 0.0
    %460 = vmatprep.subr.mxu0 0.0
    %461 = vmatpush1.msra.mxu0 0.0
    %462 = vmatprep.subr.mxu0 0.0
    %463 = vmatpush1.msra.mxu0 0.0
    %464 = vmatprep.subr.mxu0 0.0
    %465 = vmatpush1.msra.mxu0 0.0
    %466 = vmatprep.subr.mxu0 0.0
    %467 = vmatpush1.msra.mxu0 0.0
    %468 = vmatprep.subr.mxu0 0.0
    %469 = vmatpush1.msra.mxu0 0.0
    %470 = vmatprep.subr.mxu0 0.0
    %471 = vmatpush1.msra.mxu0 0.0
    %472 = vmatprep.subr.mxu0 0.0
    %473 = vmatpush1.msra.mxu0 0.0
    %474 = vmatprep.subr.mxu0 0.0
    %475 = vmatpush1.msra.mxu0 0.0
    %476 = vmatprep.subr.mxu0 0.0
    %477 = vmatpush1.msra.mxu0 0.0
    %478 = vmatprep.subr.mxu0 0.0
    %479 = vmatpush1.msra.mxu0 0.0
    %480 = vmatprep.subr.mxu0 0.0
    %481 = vmatpush1.msra.mxu0 0.0
    %482 = vmatprep.subr.mxu0 0.0
    %483 = vmatpush1.msra.mxu0 0.0
    %484 = vmatprep.subr.mxu0 0.0
    %485 = vmatpush1.msra.mxu0 0.0
    %486 = vmatprep.subr.mxu0 0.0
    %487 = vmatpush1.msra.mxu0 0.0
    %488 = vmatprep.subr.mxu0 0.0
    %489 = vmatpush1.msra.mxu0 0.0
    %490 = vmatprep.subr.mxu0 0.0
    %491 = vmatpush1.msra.mxu0 0.0
    %492 = vmatprep.subr.mxu0 0.0
    %493 = vmatpush1.msra.mxu0 0.0
    %494 = vmatprep.subr.mxu0 0.0
    %495 = vmatpush1.msra.mxu0 0.0
    %496 = vmatprep.subr.mxu0 0.0
    %497 = vmatpush1.msra.mxu0 0.0
    %498 = vmatprep.subr.mxu0 0.0
    %499 = vmatpush1.msra.mxu0 0.0
    %500 = vmatprep.subr.mxu0 0.0
    %501 = vmatpush1.msra.mxu0 0.0
    %502 = vmatprep.subr.mxu0 0.0
    %503 = vmatpush1.msra.mxu0 0.0
    %504 = vmatprep.subr.mxu0 0.0
    %505 = vmatpush1.msra.mxu0 0.0
    %506 = vmatprep.subr.mxu0 0.0
    %507 = vmatpush1.msra.mxu0 0.0
    %508 = vmatprep.subr.mxu0 0.0
    %509 = vmatpush1.msra.mxu0 0.0
    %510 = vmatprep.subr.mxu0 0.0
    %511 = vmatpush1.msra.mxu0 0.0
    %512 = vmatprep.subr.mxu0 0.0
    %513 = vmatpush1.msra.mxu0 0.0
    %514 = vmatprep.subr.mxu0 0.0
    %515 = vmatpush1.msra.mxu0 0.0
    %516 = vmatprep.subr.mxu0 0.0
    %517 = vmatpush1.msra.mxu0 0.0
    %518 = vmatprep.subr.mxu0 0.0
    %519 = vmatpush1.msra.mxu0 0.0
    %520 = vmatprep.mubr.f32.mxu0 0.0
    %v521 = vand.u32 %v151, 4294901760
    %522 = vmatmul.mubr.f32.gmra.mrb[0].mxu0 %v521
    %v523 = vpop.f32.mrb[0].mxu0
    %v524 = vadd.f32 %v450, %v523
    %v525 = vpop.f32.mrb[0].mxu0
    %526 = vdwg.mxu0
    %527 = vmatprep.subr.mxu0 0.0
    %v528 = vand.u32 %v138, 4294901760
    %529 = vmatpush1.msra.mxu0 %v528
    %530 = vmatprep.subr.mxu0 0.0
    %531 = vmatpush1.msra.mxu0 0.0
    %532 = vmatprep.subr.mxu0 0.0
    %533 = vmatpush1.msra.mxu0 0.0
    %534 = vmatprep.subr.mxu0 0.0
    %535 = vmatpush1.msra.mxu0 0.0
    %536 = vmatprep.subr.mxu0 0.0
    %537 = vmatpush1.msra.mxu0 0.0
    %538 = vmatprep.subr.mxu0 0.0
    %539 = vmatpush1.msra.mxu0 0.0
    %540 = vmatprep.subr.mxu0 0.0
    %541 = vmatpush1.msra.mxu0 0.0
    %542 = vmatprep.subr.mxu0 0.0
    %543 = vmatpush1.msra.mxu0 0.0
    %544 = vmatprep.subr.mxu0 0.0
    %545 = vmatpush1.msra.mxu0 0.0
    %546 = vmatprep.subr.mxu0 0.0
    %547 = vmatpush1.msra.mxu0 0.0
    %548 = vmatprep.subr.mxu0 0.0
    %549 = vmatpush1.msra.mxu0 0.0
    %550 = vmatprep.subr.mxu0 0.0
    %551 = vmatpush1.msra.mxu0 0.0
    %552 = vmatprep.subr.mxu0 0.0
    %553 = vmatpush1.msra.mxu0 0.0
    %554 = vmatprep.subr.mxu0 0.0
    %555 = vmatpush1.msra.mxu0 0.0
    %556 = vmatprep.subr.mxu0 0.0
    %557 = vmatpush1.msra.mxu0 0.0
    %558 = vmatprep.subr.mxu0 0.0
    %559 = vmatpush1.msra.mxu0 0.0
    %560 = vmatprep.subr.mxu0 0.0
    %561 = vmatpush1.msra.mxu0 0.0
    %562 = vmatprep.subr.mxu0 0.0
    %563 = vmatpush1.msra.mxu0 0.0
    %564 = vmatprep.subr.mxu0 0.0
    %565 = vmatpush1.msra.mxu0 0.0
    %566 = vmatprep.subr.mxu0 0.0
    %567 = vmatpush1.msra.mxu0 0.0
    %568 = vmatprep.subr.mxu0 0.0
    %569 = vmatpush1.msra.mxu0 0.0
    %570 = vmatprep.subr.mxu0 0.0
    %571 = vmatpush1.msra.mxu0 0.0
    %572 = vmatprep.subr.mxu0 0.0
    %573 = vmatpush1.msra.mxu0 0.0
    %574 = vmatprep.subr.mxu0 0.0
    %575 = vmatpush1.msra.mxu0 0.0
    %576 = vmatprep.subr.mxu0 0.0
    %577 = vmatpush1.msra.mxu0 0.0
    %578 = vmatprep.subr.mxu0 0.0
    %579 = vmatpush1.msra.mxu0 0.0
    %580 = vmatprep.subr.mxu0 0.0
    %581 = vmatpush1.msra.mxu0 0.0
    %582 = vmatprep.subr.mxu0 0.0
    %583 = vmatpush1.msra.mxu0 0.0
    %584 = vmatprep.subr.mxu0 0.0
    %585 = vmatpush1.msra.mxu0 0.0
    %586 = vmatprep.subr.mxu0 0.0
    %587 = vmatpush1.msra.mxu0 0.0
    %588 = vmatprep.subr.mxu0 0.0
    %589 = vmatpush1.msra.mxu0 0.0
    %590 = vmatprep.subr.mxu0 0.0
    %591 = vmatpush1.msra.mxu0 0.0
    %592 = vmatprep.mubr.f32.mxu0 0.0
    %v593 = vand.u32 %v151, 4294901760
    %594 = vmatmul.mubr.f32.gmra.mrb[0].mxu0 %v593
    %v595 = vpop.f32.mrb[0].mxu0
    %v596 = vadd.f32 %v524, %v595
    %v597 = vpop.f32.mrb[0].mxu0
    %598 = vdwg.mxu0
    %v599 = vadd.f32 %v137, %v596
    %vm600 = vcmask 261120
    %601 = vst.msk [vmem:[#allocation2] sm:$0xff] %vm600, %v599
    // Predicated region
    $region90: #{tpu_custom_call.1} parent=1 // pred_check
      %p602 = pneg %p131
    $region91: #{tpu_custom_call.1} parent=1 // pred_check_branch
      %604 = sbr.rel (%p602) target = $region93
    $region92: #{tpu_custom_call.1} parent=1 // pred_region
      %v605 = vld [vmem:[#allocation3] sm:$0xff]
      %v606 = vld [vmem:[#allocation2] sm:$0xff]
      %v607 = vld [vmem:[%s3] sm:$0xff]
      %v608 = vld [vmem:[%s3 + $0x8] sm:$0xff]
      %v609 = vld [vmem:[%s3 + $0x10] sm:$0xff]
      %v610 = vld [vmem:[%s3 + $0x18] sm:$0xff]
      %v611 = vld [vmem:[%s4] sm:$0xff]
      %v612 = vld [vmem:[%s4 + $0x8] sm:$0xff]
      %v613 = vld [vmem:[%s4 + $0x10] sm:$0xff]
      %v614 = vld [vmem:[%s4 + $0x18] sm:$0xff]
      %v615 = vld [vmem:[%s5] sm:$0x1]
      %v616 = vld [vmem:[%s6] sm:$0xff]
      %v617 = vld [vmem:[%s6 + $0x8] sm:$0xff]
      %v618 = vld [vmem:[%s6 + $0x10] sm:$0xff]
      %v619 = vld [vmem:[%s6 + $0x18] sm:$0xff]
      %v620 = vld [vmem:[%s6 + $0x20] sm:$0xff]
      %v621 = vld [vmem:[%s6 + $0x28] sm:$0xff]
      %v622 = vld [vmem:[%s6 + $0x30] sm:$0xff]
      %v623 = vld [vmem:[%s6 + $0x38] sm:$0xff]
      %v624 = vld [vmem:[%s6 + $0x40] sm:$0xff]
      %v625 = vld [vmem:[%s6 + $0x48] sm:$0xff]
      %v626 = vld [vmem:[%s6 + $0x50] sm:$0xff]
      %v627 = vld [vmem:[%s6 + $0x58] sm:$0xff]
      %v628 = vld [vmem:[%s6 + $0x60] sm:$0xff]
      %v629 = vld [vmem:[%s6 + $0x68] sm:$0xff]
      %v630 = vld [vmem:[%s6 + $0x70] sm:$0xff]
      %v631 = vld [vmem:[%s6 + $0x78] sm:$0xff]
      %v632 = vld [vmem:[#allocation6] sm:$0x1]
      %v633 = vld [vmem:[#allocation8] sm:$0xff]
      %v634 = vld [vmem:[#allocation8 + $0x8] sm:$0xff]
      %v635 = vld [vmem:[#allocation8 + $0x10] sm:$0xff]
      %v636 = vld [vmem:[#allocation8 + $0x18] sm:$0xff]
      %v637 = vld [vmem:[#allocation8 + $0x20] sm:$0xff]
      %v638 = vld [vmem:[#allocation8 + $0x28] sm:$0xff]
      %v639 = vld [vmem:[#allocation8 + $0x30] sm:$0xff]
      %v640 = vld [vmem:[#allocation8 + $0x38] sm:$0xff]
      %v641 = vld [vmem:[#allocation8 + $0x40] sm:$0xff]
      %v642 = vld [vmem:[#allocation8 + $0x48] sm:$0xff]
      %v643 = vld [vmem:[#allocation8 + $0x50] sm:$0xff]
      %v644 = vld [vmem:[#allocation8 + $0x58] sm:$0xff]
      %v645 = vld [vmem:[#allocation8 + $0x60] sm:$0xff]
      %v646 = vld [vmem:[#allocation8 + $0x68] sm:$0xff]
      %v647 = vld [vmem:[#allocation8 + $0x70] sm:$0xff]
      %v648 = vld [vmem:[#allocation8 + $0x78] sm:$0xff]
      %v649 = vld [vmem:[#allocation9] sm:$0x1]
      %v650 = vld [vmem:[#allocation11] sm:$0x1]
      %v651 = vld [vmem:[#allocation12] sm:$0x1]
      %v652 = vld [vmem:[%s12] sm:$0xff]
      %v653 = vld [vmem:[%s12 + $0x8] sm:$0xff]
      %v654 = vld [vmem:[%s12 + $0x10] sm:$0xff]
      %v655 = vld [vmem:[%s12 + $0x18] sm:$0xff]
      %v656 = vld [vmem:[%s12 + $0x20] sm:$0xff]
      %v657 = vld [vmem:[%s12 + $0x28] sm:$0xff]
      %v658 = vld [vmem:[%s12 + $0x30] sm:$0xff]
      %v659 = vld [vmem:[%s12 + $0x38] sm:$0xff]
      %v660 = vld [vmem:[%s12 + $0x40] sm:$0xff]
      %v661 = vld [vmem:[%s12 + $0x48] sm:$0xff]
      %v662 = vld [vmem:[%s12 + $0x50] sm:$0xff]
      %v663 = vld [vmem:[%s12 + $0x58] sm:$0xff]
      %v664 = vld [vmem:[%s12 + $0x60] sm:$0xff]
      %v665 = vld [vmem:[%s12 + $0x68] sm:$0xff]
      %v666 = vld [vmem:[%s12 + $0x70] sm:$0xff]
      %v667 = vld [vmem:[%s12 + $0x78] sm:$0xff]
      %v668 = vld [vmem:[#allocation14] sm:$0x1]
      %v670 = vsel %vm600, %v606, 0
      %672 = vmatprep.subr.mxu0 0.0
      %673 = vmatpush1.msra.mxu0 %v611
      %674 = vmatprep.subr.mxu0 0.0
      %675 = vmatpush1.msra.mxu0 %v612
      %676 = vmatprep.subr.mxu0 0.0
      %677 = vmatpush1.msra.mxu0 %v613
      %678 = vmatprep.subr.mxu0 0.0
      %679 = vmatpush1.msra.mxu0 %v614
      %680 = vmatprep.subr.mxu0 0.0
      %681 = vmatpush1.msra.mxu0 0.0
      %682 = vmatprep.subr.mxu0 0.0
      %683 = vmatpush1.msra.mxu0 0.0
      %684 = vmatprep.subr.mxu0 0.0
      %685 = vmatpush1.msra.mxu0 0.0
      %686 = vmatprep.subr.mxu0 0.0
      %687 = vmatpush1.msra.mxu0 0.0
      %688 = vmatprep.subr.mxu0 0.0
      %689 = vmatpush1.msra.mxu0 0.0
      %690 = vmatprep.subr.mxu0 0.0
      %691 = vmatpush1.msra.mxu0 0.0
      %692 = vmatprep.subr.mxu0 0.0
      %693 = vmatpush1.msra.mxu0 0.0
      %694 = vmatprep.subr.mxu0 0.0
      %695 = vmatpush1.msra.mxu0 0.0
      %696 = vmatprep.subr.mxu0 0.0
      %697 = vmatpush1.msra.mxu0 0.0
      %698 = vmatprep.subr.mxu0 0.0
      %699 = vmatpush1.msra.mxu0 0.0
      %700 = vmatprep.subr.mxu0 0.0
      %701 = vmatpush1.msra.mxu0 0.0
      %702 = vmatprep.subr.mxu0 0.0
      %703 = vmatpush1.msra.mxu0 0.0
      %704 = vmatprep.subr.mxu0 0.0
      %705 = vmatpush1.msra.mxu0 0.0
      %706 = vmatprep.subr.mxu0 0.0
      %707 = vmatpush1.msra.mxu0 0.0
      %708 = vmatprep.subr.mxu0 0.0
      %709 = vmatpush1.msra.mxu0 0.0
      %710 = vmatprep.subr.mxu0 0.0
      %711 = vmatpush1.msra.mxu0 0.0
      %712 = vmatprep.subr.mxu0 0.0
      %713 = vmatpush1.msra.mxu0 0.0
      %714 = vmatprep.subr.mxu0 0.0
      %715 = vmatpush1.msra.mxu0 0.0
      %716 = vmatprep.subr.mxu0 0.0
      %717 = vmatpush1.msra.mxu0 0.0
      %718 = vmatprep.subr.mxu0 0.0
      %719 = vmatpush1.msra.mxu0 0.0
      %720 = vmatprep.subr.mxu0 0.0
      %721 = vmatpush1.msra.mxu0 0.0
      %722 = vmatprep.subr.mxu0 0.0
      %723 = vmatpush1.msra.mxu0 0.0
      %724 = vmatprep.subr.mxu0 0.0
      %725 = vmatpush1.msra.mxu0 0.0
      %726 = vmatprep.subr.mxu0 0.0
      %727 = vmatpush1.msra.mxu0 0.0
      %728 = vmatprep.subr.mxu0 0.0
      %729 = vmatpush1.msra.mxu0 0.0
      %730 = vmatprep.subr.mxu0 0.0
      %731 = vmatpush1.msra.mxu0 0.0
      %732 = vmatprep.subr.mxu0 0.0
      %733 = vmatpush1.msra.mxu0 0.0
      %734 = vmatprep.subr.mxu0 0.0
      %735 = vmatpush1.msra.mxu0 0.0
      %736 = vmatprep.mubr.f32.mxu0 0.0
      %737 = vmatmul.mubr.f32.gmra.mrb[0].mxu0 %v670
      %v738 = vpop.f32.mrb[0].mxu0
      %v739 = vadd.f32 0.0, %v738
      %v740 = vpop.f32.mrb[0].mxu0
      %741 = vdwg.mxu0
      %v743 = vsel %vm600, %v605, 0
      %745 = vmatprep.subr.mxu0 0.0
      %746 = vmatpush1.msra.mxu0 %v607
      %747 = vmatprep.subr.mxu0 0.0
      %748 = vmatpush1.msra.mxu0 %v608
      %749 = vmatprep.subr.mxu0 0.0
      %750 = vmatpush1.msra.mxu0 %v609
      %751 = vmatprep.subr.mxu0 0.0
      %752 = vmatpush1.msra.mxu0 %v610
      %753 = vmatprep.subr.mxu0 0.0
      %754 = vmatpush1.msra.mxu0 0.0
      %755 = vmatprep.subr.mxu0 0.0
      %756 = vmatpush1.msra.mxu0 0.0
      %757 = vmatprep.subr.mxu0 0.0
      %758 = vmatpush1.msra.mxu0 0.0
      %759 = vmatprep.subr.mxu0 0.0
      %760 = vmatpush1.msra.mxu0 0.0
      %761 = vmatprep.subr.mxu0 0.0
      %762 = vmatpush1.msra.mxu0 0.0
      %763 = vmatprep.subr.mxu0 0.0
      %764 = vmatpush1.msra.mxu0 0.0
      %765 = vmatprep.subr.mxu0 0.0
      %766 = vmatpush1.msra.mxu0 0.0
      %767 = vmatprep.subr.mxu0 0.0
      %768 = vmatpush1.msra.mxu0 0.0
      %769 = vmatprep.subr.mxu0 0.0
      %770 = vmatpush1.msra.mxu0 0.0
      %771 = vmatprep.subr.mxu0 0.0
      %772 = vmatpush1.msra.mxu0 0.0
      %773 = vmatprep.subr.mxu0 0.0
      %774 = vmatpush1.msra.mxu0 0.0
      %775 = vmatprep.subr.mxu0 0.0
      %776 = vmatpush1.msra.mxu0 0.0
      %777 = vmatprep.subr.mxu0 0.0
      %778 = vmatpush1.msra.mxu0 0.0
      %779 = vmatprep.subr.mxu0 0.0
      %780 = vmatpush1.msra.mxu0 0.0
      %781 = vmatprep.subr.mxu0 0.0
      %782 = vmatpush1.msra.mxu0 0.0
      %783 = vmatprep.subr.mxu0 0.0
      %784 = vmatpush1.msra.mxu0 0.0
      %785 = vmatprep.subr.mxu0 0.0
      %786 = vmatpush1.msra.mxu0 0.0
      %787 = vmatprep.subr.mxu0 0.0
      %788 = vmatpush1.msra.mxu0 0.0
      %789 = vmatprep.subr.mxu0 0.0
      %790 = vmatpush1.msra.mxu0 0.0
      %791 = vmatprep.subr.mxu0 0.0
      %792 = vmatpush1.msra.mxu0 0.0
      %793 = vmatprep.subr.mxu0 0.0
      %794 = vmatpush1.msra.mxu0 0.0
      %795 = vmatprep.subr.mxu0 0.0
      %796 = vmatpush1.msra.mxu0 0.0
      %797 = vmatprep.subr.mxu0 0.0
      %798 = vmatpush1.msra.mxu0 0.0
      %799 = vmatprep.subr.mxu0 0.0
      %800 = vmatpush1.msra.mxu0 0.0
      %801 = vmatprep.subr.mxu0 0.0
      %802 = vmatpush1.msra.mxu0 0.0
      %803 = vmatprep.subr.mxu0 0.0
      %804 = vmatpush1.msra.mxu0 0.0
      %805 = vmatprep.subr.mxu0 0.0
      %806 = vmatpush1.msra.mxu0 0.0
      %807 = vmatprep.subr.mxu0 0.0
      %808 = vmatpush1.msra.mxu0 0.0
      %809 = vmatprep.mubr.f32.mxu0 0.0
      %810 = vmatmul.mubr.f32.gmra.mrb[0].mxu0 %v743
      %v811 = vpop.f32.mrb[0].mxu0
      %v812 = vadd.f32 %v739, %v811
      %v813 = vpop.f32.mrb[0].mxu0
      %814 = vdwg.mxu0
      %v816 = vlaneseq
      %v817 = vshrl.u32 %v816, 7
      %v818 = vsub.s32 0, %v817
      %v819 = vrot.slane %v615, %v818
      %v821 = vadd.f32 %v812, %v819
      %v822 = vmax.f32 %v821, 0.0
      %v824 = vlaneseq
      %v825 = vshrl.u32 %v824, 7
      %v826 = vsub.s32 0, %v825
      %v827 = vrot.slane %v632, %v826
      %829 = vmatprep.subr.mxu0 0.0
      %830 = vmatpush1.msra.mxu0 %v616
      %831 = vmatprep.subr.mxu0 0.0
      %832 = vmatpush1.msra.mxu0 %v617
      %833 = vmatprep.subr.mxu0 0.0
      %834 = vmatpush1.msra.mxu0 %v618
      %835 = vmatprep.subr.mxu0 0.0
      %836 = vmatpush1.msra.mxu0 %v619
      %837 = vmatprep.subr.mxu0 0.0
      %838 = vmatpush1.msra.mxu0 %v620
      %839 = vmatprep.subr.mxu0 0.0
      %840 = vmatpush1.msra.mxu0 %v621
      %841 = vmatprep.subr.mxu0 0.0
      %842 = vmatpush1.msra.mxu0 %v622
      %843 = vmatprep.subr.mxu0 0.0
      %844 = vmatpush1.msra.mxu0 %v623
      %845 = vmatprep.subr.mxu0 0.0
      %846 = vmatpush1.msra.mxu0 %v624
      %847 = vmatprep.subr.mxu0 0.0
      %848 = vmatpush1.msra.mxu0 %v625
      %849 = vmatprep.subr.mxu0 0.0
      %850 = vmatpush1.msra.mxu0 %v626
      %851 = vmatprep.subr.mxu0 0.0
      %852 = vmatpush1.msra.mxu0 %v627
      %853 = vmatprep.subr.mxu0 0.0
      %854 = vmatpush1.msra.mxu0 %v628
      %855 = vmatprep.subr.mxu0 0.0
      %856 = vmatpush1.msra.mxu0 %v629
      %857 = vmatprep.subr.mxu0 0.0
      %858 = vmatpush1.msra.mxu0 %v630
      %859 = vmatprep.subr.mxu0 0.0
      %860 = vmatpush1.msra.mxu0 %v631
      %861 = vmatprep.subr.mxu0 0.0
      %862 = vmatpush1.msra.mxu0 0.0
      %863 = vmatprep.subr.mxu0 0.0
      %864 = vmatpush1.msra.mxu0 0.0
      %865 = vmatprep.subr.mxu0 0.0
      %866 = vmatpush1.msra.mxu0 0.0
      %867 = vmatprep.subr.mxu0 0.0
      %868 = vmatpush1.msra.mxu0 0.0
      %869 = vmatprep.subr.mxu0 0.0
      %870 = vmatpush1.msra.mxu0 0.0
      %871 = vmatprep.subr.mxu0 0.0
      %872 = vmatpush1.msra.mxu0 0.0
      %873 = vmatprep.subr.mxu0 0.0
      %874 = vmatpush1.msra.mxu0 0.0
      %875 = vmatprep.subr.mxu0 0.0
      %876 = vmatpush1.msra.mxu0 0.0
      %877 = vmatprep.subr.mxu0 0.0
      %878 = vmatpush1.msra.mxu0 0.0
      %879 = vmatprep.subr.mxu0 0.0
      %880 = vmatpush1.msra.mxu0 0.0
      %881 = vmatprep.subr.mxu0 0.0
      %882 = vmatpush1.msra.mxu0 0.0
      %883 = vmatprep.subr.mxu0 0.0
      %884 = vmatpush1.msra.mxu0 0.0
      %885 = vmatprep.subr.mxu0 0.0
      %886 = vmatpush1.msra.mxu0 0.0
      %887 = vmatprep.subr.mxu0 0.0
      %888 = vmatpush1.msra.mxu0 0.0
      %889 = vmatprep.subr.mxu0 0.0
      %890 = vmatpush1.msra.mxu0 0.0
      %891 = vmatprep.subr.mxu0 0.0
      %892 = vmatpush1.msra.mxu0 0.0
      %893 = vmatprep.mubr.f32.mxu0 0.0
      %894 = vmatmul.mubr.f32.gmra.mrb[0].mxu0 %v822
      %v895 = vpop.f32.mrb[0].mxu0
      %v896 = vadd.f32 %v827, %v895
      %v897 = vpop.f32.mrb[0].mxu0
      %898 = vdwg.mxu0
      %v899 = vmax.f32 %v896, 0.0
      %v901 = vlaneseq
      %v902 = vshrl.u32 %v901, 7
      %v903 = vsub.s32 0, %v902
      %v904 = vrot.slane %v649, %v903
      %906 = vmatprep.subr.mxu0 0.0
      %907 = vmatpush1.msra.mxu0 %v633
      %908 = vmatprep.subr.mxu0 0.0
      %909 = vmatpush1.msra.mxu0 %v634
      %910 = vmatprep.subr.mxu0 0.0
      %911 = vmatpush1.msra.mxu0 %v635
      %912 = vmatprep.subr.mxu0 0.0
      %913 = vmatpush1.msra.mxu0 %v636
      %914 = vmatprep.subr.mxu0 0.0
      %915 = vmatpush1.msra.mxu0 %v637
      %916 = vmatprep.subr.mxu0 0.0
      %917 = vmatpush1.msra.mxu0 %v638
      %918 = vmatprep.subr.mxu0 0.0
      %919 = vmatpush1.msra.mxu0 %v639
      %920 = vmatprep.subr.mxu0 0.0
      %921 = vmatpush1.msra.mxu0 %v640
      %922 = vmatprep.subr.mxu0 0.0
      %923 = vmatpush1.msra.mxu0 %v641
      %924 = vmatprep.subr.mxu0 0.0
      %925 = vmatpush1.msra.mxu0 %v642
      %926 = vmatprep.subr.mxu0 0.0
      %927 = vmatpush1.msra.mxu0 %v643
      %928 = vmatprep.subr.mxu0 0.0
      %929 = vmatpush1.msra.mxu0 %v644
      %930 = vmatprep.subr.mxu0 0.0
      %931 = vmatpush1.msra.mxu0 %v645
      %932 = vmatprep.subr.mxu0 0.0
      %933 = vmatpush1.msra.mxu0 %v646
      %934 = vmatprep.subr.mxu0 0.0
      %935 = vmatpush1.msra.mxu0 %v647
      %936 = vmatprep.subr.mxu0 0.0
      %937 = vmatpush1.msra.mxu0 %v648
      %938 = vmatprep.subr.mxu0 0.0
      %939 = vmatpush1.msra.mxu0 0.0
      %940 = vmatprep.subr.mxu0 0.0
      %941 = vmatpush1.msra.mxu0 0.0
      %942 = vmatprep.subr.mxu0 0.0
      %943 = vmatpush1.msra.mxu0 0.0
      %944 = vmatprep.subr.mxu0 0.0
      %945 = vmatpush1.msra.mxu0 0.0
      %946 = vmatprep.subr.mxu0 0.0
      %947 = vmatpush1.msra.mxu0 0.0
      %948 = vmatprep.subr.mxu0 0.0
      %949 = vmatpush1.msra.mxu0 0.0
      %950 = vmatprep.subr.mxu0 0.0
      %951 = vmatpush1.msra.mxu0 0.0
      %952 = vmatprep.subr.mxu0 0.0
      %953 = vmatpush1.msra.mxu0 0.0
      %954 = vmatprep.subr.mxu0 0.0
      %955 = vmatpush1.msra.mxu0 0.0
      %956 = vmatprep.subr.mxu0 0.0
      %957 = vmatpush1.msra.mxu0 0.0
      %958 = vmatprep.subr.mxu0 0.0
      %959 = vmatpush1.msra.mxu0 0.0
      %960 = vmatprep.subr.mxu0 0.0
      %961 = vmatpush1.msra.mxu0 0.0
      %962 = vmatprep.subr.mxu0 0.0
      %963 = vmatpush1.msra.mxu0 0.0
      %964 = vmatprep.subr.mxu0 0.0
      %965 = vmatpush1.msra.mxu0 0.0
      %966 = vmatprep.subr.mxu0 0.0
      %967 = vmatpush1.msra.mxu0 0.0
      %968 = vmatprep.subr.mxu0 0.0
      %969 = vmatpush1.msra.mxu0 0.0
      %970 = vmatprep.mubr.f32.mxu0 0.0
      %971 = vmatmul.mubr.f32.gmra.mrb[0].mxu0 %v899
      %v972 = vpop.f32.mrb[0].mxu0
      %v973 = vadd.f32 %v904, %v972
      %v974 = vpop.f32.mrb[0].mxu0
      %975 = vdwg.mxu0
      %v976 = vmax.f32 %v973, 0.0
      %v977 = vlaneseq
      %v978 = vand.u32 %v977, 127
      %vm979 = vcmp.lt.s32.totalorder %v978, 64
      %v980 = vsel %vm979, 1, 0
      %v981 = vcvt.s32.f32 %v980
      %982 = vadd.xlane.f32.xlu0 %v976
      %v983 = vpop.xlane.xlu0 %982
      %v984 = vmul.f32 %v983, 0.015625
      %v985 = vsub.f32 %v976, %v984
      %v986 = vmul.f32 %v985, %v981
      %v987 = vmul.f32 %v986, %v986
      %988 = vadd.xlane.f32.xlu0 %v987
      %v989 = vpop.xlane.xlu0 %988
      %v990 = vmul.f32 %v989, 0.015625
      %v991 = vadd.f32 %v990, 1e-05
      %v992 = vrsqrt.pop %v991
      %v993 = vmul.f32 %v985, %v992
      %v995 = vlaneseq
      %v996 = vshrl.u32 %v995, 7
      %v997 = vsub.s32 0, %v996
      %v998 = vrot.slane %v650, %v997
      %v1000 = vmul.f32 %v993, %v998
      %v1002 = vlaneseq
      %v1003 = vshrl.u32 %v1002, 7
      %v1004 = vsub.s32 0, %v1003
      %v1005 = vrot.slane %v651, %v1004
      %v1007 = vadd.f32 %v1000, %v1005
      %v1009 = vlaneseq
      %v1010 = vshrl.u32 %v1009, 7
      %v1011 = vsub.s32 0, %v1010
      %v1012 = vrot.slane %v668, %v1011
      %1014 = vmatprep.subr.mxu0 0.0
      %1015 = vmatpush1.msra.mxu0 %v652
      %1016 = vmatprep.subr.mxu0 0.0
      %1017 = vmatpush1.msra.mxu0 %v653
      %1018 = vmatprep.subr.mxu0 0.0
      %1019 = vmatpush1.msra.mxu0 %v654
      %1020 = vmatprep.subr.mxu0 0.0
      %1021 = vmatpush1.msra.mxu0 %v655
      %1022 = vmatprep.subr.mxu0 0.0
      %1023 = vmatpush1.msra.mxu0 %v656
      %1024 = vmatprep.subr.mxu0 0.0
      %1025 = vmatpush1.msra.mxu0 %v657
      %1026 = vmatprep.subr.mxu0 0.0
      %1027 = vmatpush1.msra.mxu0 %v658
      %1028 = vmatprep.subr.mxu0 0.0
      %1029 = vmatpush1.msra.mxu0 %v659
      %1030 = vmatprep.subr.mxu0 0.0
      %1031 = vmatpush1.msra.mxu0 %v660
      %1032 = vmatprep.subr.mxu0 0.0
      %1033 = vmatpush1.msra.mxu0 %v661
      %1034 = vmatprep.subr.mxu0 0.0
      %1035 = vmatpush1.msra.mxu0 %v662
      %1036 = vmatprep.subr.mxu0 0.0
      %1037 = vmatpush1.msra.mxu0 %v663
      %1038 = vmatprep.subr.mxu0 0.0
      %1039 = vmatpush1.msra.mxu0 %v664
      %1040 = vmatprep.subr.mxu0 0.0
      %1041 = vmatpush1.msra.mxu0 %v665
      %1042 = vmatprep.subr.mxu0 0.0
      %1043 = vmatpush1.msra.mxu0 %v666
      %1044 = vmatprep.subr.mxu0 0.0
      %1045 = vmatpush1.msra.mxu0 %v667
      %1046 = vmatprep.subr.mxu0 0.0
      %1047 = vmatpush1.msra.mxu0 0.0
      %1048 = vmatprep.subr.mxu0 0.0
      %1049 = vmatpush1.msra.mxu0 0.0
      %1050 = vmatprep.subr.mxu0 0.0
      %1051 = vmatpush1.msra.mxu0 0.0
      %1052 = vmatprep.subr.mxu0 0.0
      %1053 = vmatpush1.msra.mxu0 0.0
      %1054 = vmatprep.subr.mxu0 0.0
      %1055 = vmatpush1.msra.mxu0 0.0
      %1056 = vmatprep.subr.mxu0 0.0
      %1057 = vmatpush1.msra.mxu0 0.0
      %1058 = vmatprep.subr.mxu0 0.0
      %1059 = vmatpush1.msra.mxu0 0.0
      %1060 = vmatprep.subr.mxu0 0.0
      %1061 = vmatpush1.msra.mxu0 0.0
      %1062 = vmatprep.subr.mxu0 0.0
      %1063 = vmatpush1.msra.mxu0 0.0
      %1064 = vmatprep.subr.mxu0 0.0
      %1065 = vmatpush1.msra.mxu0 0.0
      %1066 = vmatprep.subr.mxu0 0.0
      %1067 = vmatpush1.msra.mxu0 0.0
      %1068 = vmatprep.subr.mxu0 0.0
      %1069 = vmatpush1.msra.mxu0 0.0
      %1070 = vmatprep.subr.mxu0 0.0
      %1071 = vmatpush1.msra.mxu0 0.0
      %1072 = vmatprep.subr.mxu0 0.0
      %1073 = vmatpush1.msra.mxu0 0.0
      %1074 = vmatprep.subr.mxu0 0.0
      %1075 = vmatpush1.msra.mxu0 0.0
      %1076 = vmatprep.subr.mxu0 0.0
      %1077 = vmatpush1.msra.mxu0 0.0
      %1078 = vmatprep.mubr.f32.mxu0 0.0
      %1079 = vmatmul.mubr.f32.gmra.mrb[0].mxu0 %v1007
      %v1080 = vpop.f32.mrb[0].mxu0
      %v1081 = vadd.f32 %v1012, %v1080
      %v1082 = vpop.f32.mrb[0].mxu0
      %1083 = vdwg.mxu0
      %v1084 = vadd.f32 %v605, %v1081
      %1085 = vst.msk [vmem:[#allocation15] sm:$0xff] %vm600, %v1084
    $region93: #{tpu_custom_call.1} parent=1 // pred_fallthru
      _
    // Predicated region
    $region94: #{tpu_custom_call.1} parent=1 // pred_check
      _
    $region95: #{tpu_custom_call.1} parent=1 // pred_check_branch
      %1087 = sbr.rel (0) target = $region97
    $region96: #{tpu_custom_call.1} parent=1 // pred_region
      %s1089 = ssub.s32 128, 128
      %1090 = vsyncadd [#allocation5], %s1089
      %s1092 = sshll.u32 [#allocation15], 4
      %s1093 = int_to_ptr.vmem [resolvable:$true] %s1092
      %1095 = dma.vmem_to_hbm [thread:$0]  %s1093, 128, %s14, [#allocation5]
    $region97: #{tpu_custom_call.1} parent=1 // pred_fallthru
      _
    // Predicated region
    $region98: #{tpu_custom_call.1} parent=1 // pred_check
      _
    $region99: #{tpu_custom_call.1} parent=1 // pred_check_branch
      %1097 = sbr.rel (0) target = $region101
    $region100: #{tpu_custom_call.1} parent=1 // pred_region
      %1098 = dma.done [#allocation5], 128
    $region101: #{tpu_custom_call.1} parent=1 // pred_fallthru
      _
    %1099 = vsyncpa [#allocation4], 1
    %1100 = vsyncpa [#allocation7], 1
    %1101 = vsyncpa [#allocation10], 1
    %1102 = vsyncpa [#allocation13], 1
    %1103 = vsyncpa [#allocation5], 1

</llo_original>
